<compile_context>
chip_gen: v5e
topology: v5e:2x2
jax: 0.10.0
libtpu: 0.0.40
codegen_flags: <defaults>
</compile_context>

<pallas_src>
import jax
import jax.numpy as jnp
import numpy as np
from jax.experimental import pallas as pl
from jax.experimental.pallas import tpu as pltpu

LANES = 128
_CHUNK = 512           # cells processed per in-kernel fori_loop step
_MAX_TILE_CHUNKS = 16  # 16 * 512 = 8192 cells per grid step (~1 MiB HBM burst)


# ----------------------------------------------------------------------------
# Shared per-cell math (identical to the PyTorch reference, vectorised).
# P(c) / L(c) return same-shaped arrays of cells for prediction / label
# channel c; `cls` is the already-computed class SSE with the same shape.
# ----------------------------------------------------------------------------
def _cell_loss(P, L, cls):
    lx, ly, lw, lh = L(0), L(1), L(2), L(3)
    p0, p1, p2, p3, p4 = P(0), P(1), P(2), P(3), P(4)
    p5, p6, p7, p8, p9 = P(5), P(6), P(7), P(8), P(9)

    # Clamped IoU: identical to the reference's early-return-0 branch for valid
    # boxes and never divides by zero (degenerate / padded cells yield 0).
    def iou(bx, by, bw, bh):
        iw = (jnp.minimum(bx + 0.5 * bw, lx + 0.5 * lw)
              - jnp.maximum(bx - 0.5 * bw, lx - 0.5 * lw))
        ih = (jnp.minimum(by + 0.5 * bh, ly + 0.5 * lh)
              - jnp.maximum(by - 0.5 * bh, ly - 0.5 * lh))
        inter = jnp.maximum(iw, 0.0) * jnp.maximum(ih, 0.0)
        union = bw * bh + lw * lh - inter
        return inter / jnp.maximum(union, 1e-30)

    iou1 = iou(p0, p1, p2, p3)
    iou2 = iou(p5, p6, p7, p8)
    resp1 = iou1 > iou2                      # strict, matching `if iou1 > iou2`

    half_p4sq = 0.5 * (p4 * p4)              # reused in b2 and no-obj term
    half_p9sq = 0.5 * (p9 * p9)              # reused in b1 and no-obj term

    # Branch 1: box 0 responsible.
    b1 = (5.0 * ((lx - p0) ** 2 + (ly - p1) ** 2)
          + 5.0 * ((jnp.sqrt(lw) - jnp.sqrt(p2)) ** 2
                   + (jnp.sqrt(lh) - jnp.sqrt(p3)) ** 2)
          + (p4 - iou1) ** 2
          + half_p9sq)
    # Branch 2: box 1 responsible (label channels 5..8, as in the reference).
    b2 = (5.0 * ((L(5) - p5) ** 2 + (L(6) - p6) ** 2)
          + 5.0 * ((jnp.sqrt(L(7)) - jnp.sqrt(p7)) ** 2
                   + (jnp.sqrt(L(8)) - jnp.sqrt(p8)) ** 2)
          + (p9 - iou2) ** 2
          + half_p4sq)

    obj = L(4) == 1.0
    obj_loss = jnp.where(resp1, b1, b2) + cls
    noobj_loss = half_p4sq + half_p9sq
    return jnp.where(obj, obj_loss, noobj_loss)


# ----------------------------------------------------------------------------
# Fast path: natural-layout [TILE_M, D] tiles, in-kernel transpose.
# ----------------------------------------------------------------------------
def _make_fused_kernel(D, n_chunks, chunk, tile_m, m_total):
    def kernel(p_ref, l_ref, out_ref):
        tile_base = pl.program_id(0) * tile_m

        # Hoisted broadcasts (built once per grid step, reused by every chunk).
        cls_mask = jax.lax.broadcasted_iota(jnp.int32, (D, 1), 0) >= 10
        lane_ids = jax.lax.broadcasted_iota(jnp.int32, (1, chunk), 1)

        def body(k, acc):
            start = pl.multiple_of(k * chunk, chunk)
            xc = p_ref[pl.ds(start, chunk), :].astype(jnp.float32)  # [chunk, D]
            yc = l_ref[pl.ds(start, chunk), :].astype(jnp.float32)

            # Channel-major rearrangement on the (otherwise idle) XLU.
            pt = jnp.transpose(xc, (1, 0))                          # [D, chunk]
            lt = jnp.transpose(yc, (1, 0))

            # Class SSE: one whole-slab op + a single cross-sublane reduce.
            d = lt - pt
            cls = jnp.sum(jnp.where(cls_mask, d * d, 0.0),
                          axis=0, keepdims=True)                    # [1, chunk]

            P = lambda c: pt[c:c + 1, :]
            L = lambda c: lt[c:c + 1, :]
            per_cell = _cell_loss(P, L, cls)                        # [1, chunk]

            # Zero out padded cells / the ragged tail of the last grid block.
            cell_idx = tile_base + start + lane_ids
            per_cell = jnp.where(cell_idx < m_total, per_cell, 0.0)
            return acc + per_cell

        acc = jax.lax.fori_loop(0, n_chunks, body,
                                jnp.zeros((1, chunk), jnp.float32))
        out_ref[0] = acc

    return kernel


def _yolo_loss_fused(preds, labels, S, B):
    assert B == 2, "reference module hard-codes 2 boxes via its indexing"
    N = preds.shape[0]
    D = preds.shape[-1]
    M = N * S * S

    # Natural layout: [M, D] (a pure reshape, no HBM traffic).
    p2 = preds.reshape(M, D)
    l2 = labels.reshape(M, D)

    tile_m = _CHUNK * min(_MAX_TILE_CHUNKS, pl.cdiv(M, _CHUNK))
    if M < tile_m:
        # Tiny problems only: cheap pad so every chunk is fully aligned.
        # (Zero cells contribute exactly 0 loss and are masked anyway.)
        p2 = jnp.pad(p2, ((0, tile_m - M), (0, 0)))
        l2 = jnp.pad(l2, ((0, tile_m - M), (0, 0)))
    m_in = p2.shape[0]
    grid = pl.cdiv(m_in, tile_m)
    n_chunks = tile_m // _CHUNK

    kernel = _make_fused_kernel(D, n_chunks, _CHUNK, tile_m, M)

    partials = pl.pallas_call(
        kernel,
        out_shape=jax.ShapeDtypeStruct((grid, 1, _CHUNK), jnp.float32),
        grid_spec=pltpu.PrefetchScalarGridSpec(
            num_scalar_prefetch=0,
            grid=(grid,),
            in_specs=[
                pl.BlockSpec((tile_m, D), lambda g: (g, 0)),
                pl.BlockSpec((tile_m, D), lambda g: (g, 0)),
            ],
            out_specs=pl.BlockSpec((1, 1, _CHUNK), lambda g: (g, 0, 0)),
        ),
        compiler_params=pltpu.CompilerParams(
            dimension_semantics=("parallel",),
            vmem_limit_bytes=32 * 1024 * 1024),
    )(p2, l2)

    return jnp.sum(partials) / jnp.float32(N)


# ----------------------------------------------------------------------------
# Fallback path: channel-major staging in the wrapper (previous, proven kernel).
# Only used if the in-kernel minor-dim transpose fails to lower.
# ----------------------------------------------------------------------------
def _staged_kernel(p_ref, l_ref, out_ref):
    D = p_ref.shape[0]
    tr = p_ref.shape[1]

    def P(c):
        return p_ref[c].astype(jnp.float32)      # [TR, 128], lane-dense

    def L(c):
        return l_ref[c].astype(jnp.float32)

    cls = jnp.zeros((tr, LANES), jnp.float32)
    for c in range(10, D):
        d = L(c) - P(c)
        cls = cls + d * d

    per_cell = _cell_loss(P, L, cls)             # [TR, 128]

    partial = per_cell[0:8]
    for r in range(8, tr, 8):
        partial = partial + per_cell[r:r + 8]
    out_ref[0] = partial


def _yolo_loss_staged(preds, labels, S, B):
    assert B == 2
    N = preds.shape[0]
    D = preds.shape[-1]
    M = N * S * S

    rows = -(-M // LANES)
    tile_rows = min(32, -(-rows // 8) * 8)
    rows_pad = -(-rows // tile_rows) * tile_rows
    G = rows_pad // tile_rows
    M_pad = rows_pad * LANES

    def to_lane_dense(x):
        x2 = x.reshape(M, D)
        x2 = jnp.pad(x2, ((0, M_pad - M), (0, 0)))
        return x2.T.reshape(D, rows_pad, LANES)

    p3 = to_lane_dense(preds)
    l3 = to_lane_dense(labels)

    partials = pl.pallas_call(
        _staged_kernel,
        out_shape=jax.ShapeDtypeStruct((G, 8, LANES), jnp.float32),
        grid_spec=pltpu.PrefetchScalarGridSpec(
            num_scalar_prefetch=0,
            grid=(G,),
            in_specs=[
                pl.BlockSpec((D, tile_rows, LANES), lambda g: (0, g, 0)),
                pl.BlockSpec((D, tile_rows, LANES), lambda g: (0, g, 0)),
            ],
            out_specs=pl.BlockSpec((1, 8, LANES), lambda g: (g, 0, 0)),
        ),
        compiler_params=pltpu.CompilerParams(
            dimension_semantics=("parallel",)),
    )(p3, l3)

    return jnp.sum(partials) / jnp.float32(N)


def yolo_v1_loss(preds, labels, S, B):
    """Pallas implementation of YOLOv1Loss(S, B).forward(preds, labels)."""
    try:
        out = _yolo_loss_fused(preds, labels, S, B)
        return jax.block_until_ready(out)
    except Exception:
        # TODO(synk): drop this fallback once minor-dim in-kernel transposes
        # are guaranteed to lower on every deployed Mosaic version.
        return _yolo_loss_staged(preds, labels, S, B)


# ----------------------------------------------------------------------------
# Direct NumPy port of the PyTorch reference (scalar loops), for verification.
# ----------------------------------------------------------------------------
def _reference_loss_np(preds, labels, S, B):
    preds = np.asarray(preds, dtype=np.float64)
    labels = np.asarray(labels, dtype=np.float64)

    def calc_iou(b1, b2):
        a1, a2 = b1[2] * b1[3], b2[2] * b2[3]
        max_left = max(b1[0] - b1[2] / 2, b2[0] - b2[2] / 2)
        min_right = min(b1[0] + b1[2] / 2, b2[0] + b2[2] / 2)
        max_top = max(b1[1] - b1[3] / 2, b2[1] - b2[3] / 2)
        min_bottom = min(b1[1] + b1[3] / 2, b2[1] + b2[3] / 2)
        if min_right <= max_left or min_bottom <= max_top:
            return 0.0
        inter = (min_right - max_left) * (min_bottom - max_top)
        return inter / (a1 + a2 - inter)

    n = labels.shape[0]
    loss = 0.0
    for i in range(n):
        for y in range(S):
            for x in range(S):
                if labels[i, y, x, 4] == 1:
                    lab = labels[i, y, x, 0:4]
                    iou1 = calc_iou(preds[i, y, x, 0:4], lab)
                    iou2 = calc_iou(preds[i, y, x, 5:9], lab)
                    if iou1 > iou2:
                        loss += 5 * np.sum((labels[i, y, x, 0:2] - preds[i, y, x, 0:2]) ** 2)
                        loss += 5 * np.sum((np.sqrt(labels[i, y, x, 2:4]) - np.sqrt(preds[i, y, x, 2:4])) ** 2)
                        loss += (preds[i, y, x, 4] - iou1) ** 2
                        loss += 0.5 * preds[i, y, x, 9] ** 2
                    else:
                        loss += 5 * np.sum((labels[i, y, x, 5:7] - preds[i, y, x, 5:7]) ** 2)
                        loss += 5 * np.sum((np.sqrt(labels[i, y, x, 7:9]) - np.sqrt(preds[i, y, x, 7:9])) ** 2)
                        loss += (preds[i, y, x, 9] - iou2) ** 2
                        loss += 0.5 * preds[i, y, x, 4] ** 2
                    loss += np.sum((labels[i, y, x, 10:] - preds[i, y, x, 10:]) ** 2)
                else:
                    loss += 0.5 * (preds[i, y, x, 4] ** 2 + preds[i, y, x, 9] ** 2)
    return loss / n


if __name__ == "__main__":
    S, B, C = 7, 2, 20          # YOLOv1 defaults (D = 5*B + C = 30)
    batch = 2
    D = 5 * B + C

    key = jax.random.PRNGKey(0)
    k_p, k_l, k_obj = jax.random.split(key, 3)

    # Box / class fields in (0, 1) so the sqrt terms stay real, matching
    # typical sigmoid-normalized YOLO outputs.
    preds = jax.random.uniform(k_p, (batch, S, S, D), dtype=jnp.float32,
                               minval=0.01, maxval=0.99)
    labels = jax.random.uniform(k_l, (batch, S, S, D), dtype=jnp.float32,
                                minval=0.01, maxval=0.99)
    obj_mask = jax.random.bernoulli(k_obj, p=0.4, shape=(batch, S, S))
    labels = labels.at[..., 4].set(obj_mask.astype(jnp.float32))

    loss = yolo_v1_loss(preds, labels, S, B)
    loss = jax.block_until_ready(loss)

    ref = _reference_loss_np(preds, labels, S, B)
    np.testing.assert_allclose(np.float64(loss), ref, rtol=2e-3, atol=1e-3)

    print("KERNEL_OK")
</pallas_src>

<mosaic_0001>
module attributes {stable_mosaic.version = 11 : i64} {
  func.func @kernel(%arg0: i32, %arg1: memref<512x30xf32, #tpu.memory_space<vmem>>, %arg2: memref<512x30xf32, #tpu.memory_space<vmem>>, %arg3: memref<1x1x512xf32, #tpu.memory_space<vmem>>) attributes {dimension_semantics = [#tpu.dimension_semantics<parallel>], iteration_bounds = array<i64: 1>, scalar_prefetch = 0 : i64, scratch_operands = 0 : i64, tpu.core_type = #tpu.core_type<tc>, window_params = [{transform_indices = @transform_0, window_bounds = array<i64: 512, 30>}, {transform_indices = @transform_1, window_bounds = array<i64: 512, 30>}, {transform_indices = @transform_2, window_bounds = array<i64: 1, 1, 512>}]} {
    %c512_i32 = arith.constant 512 : i32
    %0 = arith.muli %arg0, %c512_i32 : i32
    %1 = tpu.iota {dimensions = array<i32: 0>} : vector<30x1xi32>
    %c10_i32 = arith.constant 10 : i32
    %2 = vector.broadcast %c10_i32 : i32 to vector<30x1xi32>
    %3 = arith.cmpi sge, %1, %2 : vector<30x1xi32>
    %4 = tpu.iota {dimensions = array<i32: 1>} : vector<1x512xi32>
    %cst = arith.constant 0.000000e+00 : f32
    %5 = vector.broadcast %cst : f32 to vector<1x512xf32>
    %c0_i32 = arith.constant 0 : i32
    %c512_i32_0 = arith.constant 512 : i32
    %6 = arith.muli %c0_i32, %c512_i32_0 : i32
    %7 = tpu.assume_multiple %6, 512 : i32
    %8 = arith.index_cast %7 : i32 to index
    %c0 = arith.constant 0 : index
    %9 = vector.load %arg1[%8, %c0] : memref<512x30xf32, #tpu.memory_space<vmem>>, vector<512x30xf32>
    %10 = arith.index_cast %7 : i32 to index
    %c0_1 = arith.constant 0 : index
    %11 = vector.load %arg2[%10, %c0_1] : memref<512x30xf32, #tpu.memory_space<vmem>>, vector<512x30xf32>
    %12 = tpu.transpose %9, [1, 0] : vector<512x30xf32> -> vector<30x512xf32>
    %13 = tpu.transpose %11, [1, 0] : vector<512x30xf32> -> vector<30x512xf32>
    %14 = arith.subf %13, %12 : vector<30x512xf32>
    %15 = arith.mulf %14, %14 : vector<30x512xf32>
    %cst_2 = arith.constant 0.000000e+00 : f32
    %16 = vector.shape_cast %3 : vector<30x1xi1> to vector<30x1xi1>
    %17 = vector.broadcast %16 : vector<30x1xi1> to vector<30x512xi1>
    %18 = vector.broadcast %cst_2 : f32 to vector<30x512xf32>
    %19 = arith.select %17, %15, %18 : vector<30x512xi1>, vector<30x512xf32>
    %cst_3 = arith.constant dense<0.000000e+00> : vector<512xf32>
    %20 = vector.multi_reduction <add>, %19, %cst_3 [0] : vector<30x512xf32> to vector<512xf32>
    %21 = vector.shape_cast %20 : vector<512xf32> to vector<1x512xf32>
    %22 = vector.extract_strided_slice %13 {offsets = [0, 0], sizes = [1, 512], strides = [1, 1]} : vector<30x512xf32> to vector<1x512xf32>
    %23 = vector.extract_strided_slice %13 {offsets = [1, 0], sizes = [1, 512], strides = [1, 1]} : vector<30x512xf32> to vector<1x512xf32>
    %24 = vector.extract_strided_slice %13 {offsets = [2, 0], sizes = [1, 512], strides = [1, 1]} : vector<30x512xf32> to vector<1x512xf32>
    %25 = vector.extract_strided_slice %13 {offsets = [3, 0], sizes = [1, 512], strides = [1, 1]} : vector<30x512xf32> to vector<1x512xf32>
    %26 = vector.extract_strided_slice %12 {offsets = [0, 0], sizes = [1, 512], strides = [1, 1]} : vector<30x512xf32> to vector<1x512xf32>
    %27 = vector.extract_strided_slice %12 {offsets = [1, 0], sizes = [1, 512], strides = [1, 1]} : vector<30x512xf32> to vector<1x512xf32>
    %28 = vector.extract_strided_slice %12 {offsets = [2, 0], sizes = [1, 512], strides = [1, 1]} : vector<30x512xf32> to vector<1x512xf32>
    %29 = vector.extract_strided_slice %12 {offsets = [3, 0], sizes = [1, 512], strides = [1, 1]} : vector<30x512xf32> to vector<1x512xf32>
    %30 = vector.extract_strided_slice %12 {offsets = [4, 0], sizes = [1, 512], strides = [1, 1]} : vector<30x512xf32> to vector<1x512xf32>
    %31 = vector.extract_strided_slice %12 {offsets = [5, 0], sizes = [1, 512], strides = [1, 1]} : vector<30x512xf32> to vector<1x512xf32>
    %32 = vector.extract_strided_slice %12 {offsets = [6, 0], sizes = [1, 512], strides = [1, 1]} : vector<30x512xf32> to vector<1x512xf32>
    %33 = vector.extract_strided_slice %12 {offsets = [7, 0], sizes = [1, 512], strides = [1, 1]} : vector<30x512xf32> to vector<1x512xf32>
    %34 = vector.extract_strided_slice %12 {offsets = [8, 0], sizes = [1, 512], strides = [1, 1]} : vector<30x512xf32> to vector<1x512xf32>
    %35 = vector.extract_strided_slice %12 {offsets = [9, 0], sizes = [1, 512], strides = [1, 1]} : vector<30x512xf32> to vector<1x512xf32>
    %cst_4 = arith.constant 5.000000e-01 : f32
    %36 = vector.broadcast %cst_4 : f32 to vector<1x512xf32>
    %37 = arith.mulf %36, %28 : vector<1x512xf32>
    %38 = arith.addf %26, %37 : vector<1x512xf32>
    %cst_5 = arith.constant 5.000000e-01 : f32
    %39 = vector.broadcast %cst_5 : f32 to vector<1x512xf32>
    %40 = arith.mulf %39, %24 : vector<1x512xf32>
    %41 = arith.addf %22, %40 : vector<1x512xf32>
    %42 = arith.minimumf %38, %41 : vector<1x512xf32>
    %cst_6 = arith.constant 5.000000e-01 : f32
    %43 = vector.broadcast %cst_6 : f32 to vector<1x512xf32>
    %44 = arith.mulf %43, %28 : vector<1x512xf32>
    %45 = arith.subf %26, %44 : vector<1x512xf32>
    %cst_7 = arith.constant 5.000000e-01 : f32
    %46 = vector.broadcast %cst_7 : f32 to vector<1x512xf32>
    %47 = arith.mulf %46, %24 : vector<1x512xf32>
    %48 = arith.subf %22, %47 : vector<1x512xf32>
    %49 = arith.maximumf %45, %48 : vector<1x512xf32>
    %50 = arith.subf %42, %49 : vector<1x512xf32>
    %cst_8 = arith.constant 5.000000e-01 : f32
    %51 = vector.broadcast %cst_8 : f32 to vector<1x512xf32>
    %52 = arith.mulf %51, %29 : vector<1x512xf32>
    %53 = arith.addf %27, %52 : vector<1x512xf32>
    %cst_9 = arith.constant 5.000000e-01 : f32
    %54 = vector.broadcast %cst_9 : f32 to vector<1x512xf32>
    %55 = arith.mulf %54, %25 : vector<1x512xf32>
    %56 = arith.addf %23, %55 : vector<1x512xf32>
    %57 = arith.minimumf %53, %56 : vector<1x512xf32>
    %cst_10 = arith.constant 5.000000e-01 : f32
    %58 = vector.broadcast %cst_10 : f32 to vector<1x512xf32>
    %59 = arith.mulf %58, %29 : vector<1x512xf32>
    %60 = arith.subf %27, %59 : vector<1x512xf32>
    %cst_11 = arith.constant 5.000000e-01 : f32
    %61 = vector.broadcast %cst_11 : f32 to vector<1x512xf32>
    %62 = arith.mulf %61, %25 : vector<1x512xf32>
    %63 = arith.subf %23, %62 : vector<1x512xf32>
    %64 = arith.maximumf %60, %63 : vector<1x512xf32>
    %65 = arith.subf %57, %64 : vector<1x512xf32>
    %cst_12 = arith.constant 0.000000e+00 : f32
    %66 = vector.broadcast %cst_12 : f32 to vector<1x512xf32>
    %67 = arith.maximumf %50, %66 : vector<1x512xf32>
    %cst_13 = arith.constant 0.000000e+00 : f32
    %68 = vector.broadcast %cst_13 : f32 to vector<1x512xf32>
    %69 = arith.maximumf %65, %68 : vector<1x512xf32>
    %70 = arith.mulf %67, %69 : vector<1x512xf32>
    %71 = arith.mulf %28, %29 : vector<1x512xf32>
    %72 = arith.mulf %24, %25 : vector<1x512xf32>
    %73 = arith.addf %71, %72 : vector<1x512xf32>
    %74 = arith.subf %73, %70 : vector<1x512xf32>
    %cst_14 = arith.constant 1.000000e-30 : f32
    %75 = vector.broadcast %cst_14 : f32 to vector<1x512xf32>
    %76 = arith.maximumf %74, %75 : vector<1x512xf32>
    %77 = arith.divf %70, %76 : vector<1x512xf32>
    %cst_15 = arith.constant 5.000000e-01 : f32
    %78 = vector.broadcast %cst_15 : f32 to vector<1x512xf32>
    %79 = arith.mulf %78, %33 : vector<1x512xf32>
    %80 = arith.addf %31, %79 : vector<1x512xf32>
    %cst_16 = arith.constant 5.000000e-01 : f32
    %81 = vector.broadcast %cst_16 : f32 to vector<1x512xf32>
    %82 = arith.mulf %81, %24 : vector<1x512xf32>
    %83 = arith.addf %22, %82 : vector<1x512xf32>
    %84 = arith.minimumf %80, %83 : vector<1x512xf32>
    %cst_17 = arith.constant 5.000000e-01 : f32
    %85 = vector.broadcast %cst_17 : f32 to vector<1x512xf32>
    %86 = arith.mulf %85, %33 : vector<1x512xf32>
    %87 = arith.subf %31, %86 : vector<1x512xf32>
    %cst_18 = arith.constant 5.000000e-01 : f32
    %88 = vector.broadcast %cst_18 : f32 to vector<1x512xf32>
    %89 = arith.mulf %88, %24 : vector<1x512xf32>
    %90 = arith.subf %22, %89 : vector<1x512xf32>
    %91 = arith.maximumf %87, %90 : vector<1x512xf32>
    %92 = arith.subf %84, %91 : vector<1x512xf32>
    %cst_19 = arith.constant 5.000000e-01 : f32
    %93 = vector.broadcast %cst_19 : f32 to vector<1x512xf32>
    %94 = arith.mulf %93, %34 : vector<1x512xf32>
    %95 = arith.addf %32, %94 : vector<1x512xf32>
    %cst_20 = arith.constant 5.000000e-01 : f32
    %96 = vector.broadcast %cst_20 : f32 to vector<1x512xf32>
    %97 = arith.mulf %96, %25 : vector<1x512xf32>
    %98 = arith.addf %23, %97 : vector<1x512xf32>
    %99 = arith.minimumf %95, %98 : vector<1x512xf32>
    %cst_21 = arith.constant 5.000000e-01 : f32
    %100 = vector.broadcast %cst_21 : f32 to vector<1x512xf32>
    %101 = arith.mulf %100, %34 : vector<1x512xf32>
    %102 = arith.subf %32, %101 : vector<1x512xf32>
    %cst_22 = arith.constant 5.000000e-01 : f32
    %103 = vector.broadcast %cst_22 : f32 to vector<1x512xf32>
    %104 = arith.mulf %103, %25 : vector<1x512xf32>
    %105 = arith.subf %23, %104 : vector<1x512xf32>
    %106 = arith.maximumf %102, %105 : vector<1x512xf32>
    %107 = arith.subf %99, %106 : vector<1x512xf32>
    %cst_23 = arith.constant 0.000000e+00 : f32
    %108 = vector.broadcast %cst_23 : f32 to vector<1x512xf32>
    %109 = arith.maximumf %92, %108 : vector<1x512xf32>
    %cst_24 = arith.constant 0.000000e+00 : f32
    %110 = vector.broadcast %cst_24 : f32 to vector<1x512xf32>
    %111 = arith.maximumf %107, %110 : vector<1x512xf32>
    %112 = arith.mulf %109, %111 : vector<1x512xf32>
    %113 = arith.mulf %33, %34 : vector<1x512xf32>
    %114 = arith.mulf %24, %25 : vector<1x512xf32>
    %115 = arith.addf %113, %114 : vector<1x512xf32>
    %116 = arith.subf %115, %112 : vector<1x512xf32>
    %cst_25 = arith.constant 1.000000e-30 : f32
    %117 = vector.broadcast %cst_25 : f32 to vector<1x512xf32>
    %118 = arith.maximumf %116, %117 : vector<1x512xf32>
    %119 = arith.divf %112, %118 : vector<1x512xf32>
    %120 = arith.cmpf ogt, %77, %119 : vector<1x512xf32>
    %121 = arith.mulf %30, %30 : vector<1x512xf32>
    %cst_26 = arith.constant 5.000000e-01 : f32
    %122 = vector.broadcast %cst_26 : f32 to vector<1x512xf32>
    %123 = arith.mulf %122, %121 : vector<1x512xf32>
    %124 = arith.mulf %35, %35 : vector<1x512xf32>
    %cst_27 = arith.constant 5.000000e-01 : f32
    %125 = vector.broadcast %cst_27 : f32 to vector<1x512xf32>
    %126 = arith.mulf %125, %124 : vector<1x512xf32>
    %127 = arith.subf %22, %26 : vector<1x512xf32>
    %128 = arith.mulf %127, %127 : vector<1x512xf32>
    %129 = arith.subf %23, %27 : vector<1x512xf32>
    %130 = arith.mulf %129, %129 : vector<1x512xf32>
    %131 = arith.addf %128, %130 : vector<1x512xf32>
    %cst_28 = arith.constant 5.000000e+00 : f32
    %132 = vector.broadcast %cst_28 : f32 to vector<1x512xf32>
    %133 = arith.mulf %132, %131 : vector<1x512xf32>
    %134 = math.sqrt %24 : vector<1x512xf32>
    %135 = math.sqrt %28 : vector<1x512xf32>
    %136 = arith.subf %134, %135 : vector<1x512xf32>
    %137 = arith.mulf %136, %136 : vector<1x512xf32>
    %138 = math.sqrt %25 : vector<1x512xf32>
    %139 = math.sqrt %29 : vector<1x512xf32>
    %140 = arith.subf %138, %139 : vector<1x512xf32>
    %141 = arith.mulf %140, %140 : vector<1x512xf32>
    %142 = arith.addf %137, %141 : vector<1x512xf32>
    %cst_29 = arith.constant 5.000000e+00 : f32
    %143 = vector.broadcast %cst_29 : f32 to vector<1x512xf32>
    %144 = arith.mulf %143, %142 : vector<1x512xf32>
    %145 = arith.addf %133, %144 : vector<1x512xf32>
    %146 = arith.subf %30, %77 : vector<1x512xf32>
    %147 = arith.mulf %146, %146 : vector<1x512xf32>
    %148 = arith.addf %145, %147 : vector<1x512xf32>
    %149 = arith.addf %148, %126 : vector<1x512xf32>
    %150 = vector.extract_strided_slice %13 {offsets = [5, 0], sizes = [1, 512], strides = [1, 1]} : vector<30x512xf32> to vector<1x512xf32>
    %151 = arith.subf %150, %31 : vector<1x512xf32>
    %152 = arith.mulf %151, %151 : vector<1x512xf32>
    %153 = vector.extract_strided_slice %13 {offsets = [6, 0], sizes = [1, 512], strides = [1, 1]} : vector<30x512xf32> to vector<1x512xf32>
    %154 = arith.subf %153, %32 : vector<1x512xf32>
    %155 = arith.mulf %154, %154 : vector<1x512xf32>
    %156 = arith.addf %152, %155 : vector<1x512xf32>
    %cst_30 = arith.constant 5.000000e+00 : f32
    %157 = vector.broadcast %cst_30 : f32 to vector<1x512xf32>
    %158 = arith.mulf %157, %156 : vector<1x512xf32>
    %159 = vector.extract_strided_slice %13 {offsets = [7, 0], sizes = [1, 512], strides = [1, 1]} : vector<30x512xf32> to vector<1x512xf32>
    %160 = math.sqrt %159 : vector<1x512xf32>
    %161 = math.sqrt %33 : vector<1x512xf32>
    %162 = arith.subf %160, %161 : vector<1x512xf32>
    %163 = arith.mulf %162, %162 : vector<1x512xf32>
    %164 = vector.extract_strided_slice %13 {offsets = [8, 0], sizes = [1, 512], strides = [1, 1]} : vector<30x512xf32> to vector<1x512xf32>
    %165 = math.sqrt %164 : vector<1x512xf32>
    %166 = math.sqrt %34 : vector<1x512xf32>
    %167 = arith.subf %165, %166 : vector<1x512xf32>
    %168 = arith.mulf %167, %167 : vector<1x512xf32>
    %169 = arith.addf %163, %168 : vector<1x512xf32>
    %cst_31 = arith.constant 5.000000e+00 : f32
    %170 = vector.broadcast %cst_31 : f32 to vector<1x512xf32>
    %171 = arith.mulf %170, %169 : vector<1x512xf32>
    %172 = arith.addf %158, %171 : vector<1x512xf32>
    %173 = arith.subf %35, %119 : vector<1x512xf32>
    %174 = arith.mulf %173, %173 : vector<1x512xf32>
    %175 = arith.addf %172, %174 : vector<1x512xf32>
    %176 = arith.addf %175, %123 : vector<1x512xf32>
    %177 = vector.extract_strided_slice %13 {offsets = [4, 0], sizes = [1, 512], strides = [1, 1]} : vector<30x512xf32> to vector<1x512xf32>
    %cst_32 = arith.constant 1.000000e+00 : f32
    %178 = vector.broadcast %cst_32 : f32 to vector<1x512xf32>
    %179 = arith.cmpf oeq, %177, %178 : vector<1x512xf32>
    %180 = arith.select %120, %149, %176 : vector<1x512xi1>, vector<1x512xf32>
    %181 = arith.addf %180, %21 : vector<1x512xf32>
    %182 = arith.addf %123, %126 : vector<1x512xf32>
    %183 = arith.select %179, %181, %182 : vector<1x512xi1>, vector<1x512xf32>
    %184 = arith.addi %0, %7 : i32
    %185 = vector.broadcast %184 : i32 to vector<1x512xi32>
    %186 = arith.addi %185, %4 : vector<1x512xi32>
    %c98_i32 = arith.constant 98 : i32
    %187 = vector.broadcast %c98_i32 : i32 to vector<1x512xi32>
    %188 = arith.cmpi slt, %186, %187 : vector<1x512xi32>
    %cst_33 = arith.constant 0.000000e+00 : f32
    %189 = vector.broadcast %cst_33 : f32 to vector<1x512xf32>
    %190 = arith.select %188, %183, %189 : vector<1x512xi1>, vector<1x512xf32>
    %191 = arith.addf %5, %190 : vector<1x512xf32>
    %c1_i32 = arith.constant 1 : i32
    %c0_34 = arith.constant 0 : index
    %c0_35 = arith.constant 0 : index
    %c0_36 = arith.constant 0 : index
    %192 = vector.load %arg3[%c0_34, %c0_35, %c0_36] : memref<1x1x512xf32, #tpu.memory_space<vmem>>, vector<1x1x512xf32>
    %193 = vector.shape_cast %192 : vector<1x1x512xf32> to vector<1x512xf32>
    %194 = vector.shape_cast %191 : vector<1x512xf32> to vector<1x1x512xf32>
    tpu.vector_store %arg3[%c0_34, %c0_35, %c0_36], %194 {strides = array<i32>} : memref<1x1x512xf32, #tpu.memory_space<vmem>>, vector<1x1x512xf32>,
    return
  }
  func.func @transform_0(%arg0: i32) -> (i32, i32) {
    %c0_i32 = arith.constant 0 : i32
    %c0_i32_0 = arith.constant 0 : i32
    return %arg0, %c0_i32 : i32, i32
  }
  func.func @transform_1(%arg0: i32) -> (i32, i32) {
    %c0_i32 = arith.constant 0 : i32
    %c0_i32_0 = arith.constant 0 : i32
    return %arg0, %c0_i32 : i32, i32
  }
  func.func @transform_2(%arg0: i32) -> (i32, i32, i32) {
    %c0_i32 = arith.constant 0 : i32
    %c0_i32_0 = arith.constant 0 : i32
    %c0_i32_1 = arith.constant 0 : i32
    return %arg0, %c0_i32, %c0_i32_0 : i32, i32, i32
  }
}

module attributes {stable_mosaic.version = 11 : i64} {
  func.func @_staged_kernel(%arg0: i32, %arg1: memref<30x8x128xf32, #tpu.memory_space<vmem>>, %arg2: memref<30x8x128xf32, #tpu.memory_space<vmem>>, %arg3: memref<1x8x128xf32, #tpu.memory_space<vmem>>) attributes {dimension_semantics = [#tpu.dimension_semantics<parallel>], iteration_bounds = array<i64: 1>, scalar_prefetch = 0 : i64, scratch_operands = 0 : i64, tpu.core_type = #tpu.core_type<tc>, window_params = [{transform_indices = @transform_0, window_bounds = array<i64: 30, 8, 128>}, {transform_indices = @transform_1, window_bounds = array<i64: 30, 8, 128>}, {transform_indices = @transform_2, window_bounds = array<i64: 1, 8, 128>}]} {
    %cst = arith.constant 0.000000e+00 : f32
    %0 = vector.broadcast %cst : f32 to vector<8x128xf32>
    %c10 = arith.constant 10 : index
    %c0 = arith.constant 0 : index
    %c0_0 = arith.constant 0 : index
    %1 = vector.load %arg2[%c10, %c0, %c0_0] : memref<30x8x128xf32, #tpu.memory_space<vmem>>, vector<1x8x128xf32>
    %2 = vector.shape_cast %1 : vector<1x8x128xf32> to vector<8x128xf32>
    %c10_1 = arith.constant 10 : index
    %c0_2 = arith.constant 0 : index
    %c0_3 = arith.constant 0 : index
    %3 = vector.load %arg1[%c10_1, %c0_2, %c0_3] : memref<30x8x128xf32, #tpu.memory_space<vmem>>, vector<1x8x128xf32>
    %4 = vector.shape_cast %3 : vector<1x8x128xf32> to vector<8x128xf32>
    %5 = arith.subf %2, %4 : vector<8x128xf32>
    %6 = arith.mulf %5, %5 : vector<8x128xf32>
    %7 = arith.addf %0, %6 : vector<8x128xf32>
    %c11 = arith.constant 11 : index
    %c0_4 = arith.constant 0 : index
    %c0_5 = arith.constant 0 : index
    %8 = vector.load %arg2[%c11, %c0_4, %c0_5] : memref<30x8x128xf32, #tpu.memory_space<vmem>>, vector<1x8x128xf32>
    %9 = vector.shape_cast %8 : vector<1x8x128xf32> to vector<8x128xf32>
    %c11_6 = arith.constant 11 : index
    %c0_7 = arith.constant 0 : index
    %c0_8 = arith.constant 0 : index
    %10 = vector.load %arg1[%c11_6, %c0_7, %c0_8] : memref<30x8x128xf32, #tpu.memory_space<vmem>>, vector<1x8x128xf32>
    %11 = vector.shape_cast %10 : vector<1x8x128xf32> to vector<8x128xf32>
    %12 = arith.subf %9, %11 : vector<8x128xf32>
    %13 = arith.mulf %12, %12 : vector<8x128xf32>
    %14 = arith.addf %7, %13 : vector<8x128xf32>
    %c12 = arith.constant 12 : index
    %c0_9 = arith.constant 0 : index
    %c0_10 = arith.constant 0 : index
    %15 = vector.load %arg2[%c12, %c0_9, %c0_10] : memref<30x8x128xf32, #tpu.memory_space<vmem>>, vector<1x8x128xf32>
    %16 = vector.shape_cast %15 : vector<1x8x128xf32> to vector<8x128xf32>
    %c12_11 = arith.constant 12 : index
    %c0_12 = arith.constant 0 : index
    %c0_13 = arith.constant 0 : index
    %17 = vector.load %arg1[%c12_11, %c0_12, %c0_13] : memref<30x8x128xf32, #tpu.memory_space<vmem>>, vector<1x8x128xf32>
    %18 = vector.shape_cast %17 : vector<1x8x128xf32> to vector<8x128xf32>
    %19 = arith.subf %16, %18 : vector<8x128xf32>
    %20 = arith.mulf %19, %19 : vector<8x128xf32>
    %21 = arith.addf %14, %20 : vector<8x128xf32>
    %c13 = arith.constant 13 : index
    %c0_14 = arith.constant 0 : index
    %c0_15 = arith.constant 0 : index
    %22 = vector.load %arg2[%c13, %c0_14, %c0_15] : memref<30x8x128xf32, #tpu.memory_space<vmem>>, vector<1x8x128xf32>
    %23 = vector.shape_cast %22 : vector<1x8x128xf32> to vector<8x128xf32>
    %c13_16 = arith.constant 13 : index
    %c0_17 = arith.constant 0 : index
    %c0_18 = arith.constant 0 : index
    %24 = vector.load %arg1[%c13_16, %c0_17, %c0_18] : memref<30x8x128xf32, #tpu.memory_space<vmem>>, vector<1x8x128xf32>
    %25 = vector.shape_cast %24 : vector<1x8x128xf32> to vector<8x128xf32>
    %26 = arith.subf %23, %25 : vector<8x128xf32>
    %27 = arith.mulf %26, %26 : vector<8x128xf32>
    %28 = arith.addf %21, %27 : vector<8x128xf32>
    %c14 = arith.constant 14 : index
    %c0_19 = arith.constant 0 : index
    %c0_20 = arith.constant 0 : index
    %29 = vector.load %arg2[%c14, %c0_19, %c0_20] : memref<30x8x128xf32, #tpu.memory_space<vmem>>, vector<1x8x128xf32>
    %30 = vector.shape_cast %29 : vector<1x8x128xf32> to vector<8x128xf32>
    %c14_21 = arith.constant 14 : index
    %c0_22 = arith.constant 0 : index
    %c0_23 = arith.constant 0 : index
    %31 = vector.load %arg1[%c14_21, %c0_22, %c0_23] : memref<30x8x128xf32, #tpu.memory_space<vmem>>, vector<1x8x128xf32>
    %32 = vector.shape_cast %31 : vector<1x8x128xf32> to vector<8x128xf32>
    %33 = arith.subf %30, %32 : vector<8x128xf32>
    %34 = arith.mulf %33, %33 : vector<8x128xf32>
    %35 = arith.addf %28, %34 : vector<8x128xf32>
    %c15 = arith.constant 15 : index
    %c0_24 = arith.constant 0 : index
    %c0_25 = arith.constant 0 : index
    %36 = vector.load %arg2[%c15, %c0_24, %c0_25] : memref<30x8x128xf32, #tpu.memory_space<vmem>>, vector<1x8x128xf32>
    %37 = vector.shape_cast %36 : vector<1x8x128xf32> to vector<8x128xf32>
    %c15_26 = arith.constant 15 : index
    %c0_27 = arith.constant 0 : index
    %c0_28 = arith.constant 0 : index
    %38 = vector.load %arg1[%c15_26, %c0_27, %c0_28] : memref<30x8x128xf32, #tpu.memory_space<vmem>>, vector<1x8x128xf32>
    %39 = vector.shape_cast %38 : vector<1x8x128xf32> to vector<8x128xf32>
    %40 = arith.subf %37, %39 : vector<8x128xf32>
    %41 = arith.mulf %40, %40 : vector<8x128xf32>
    %42 = arith.addf %35, %41 : vector<8x128xf32>
    %c16 = arith.constant 16 : index
    %c0_29 = arith.constant 0 : index
    %c0_30 = arith.constant 0 : index
    %43 = vector.load %arg2[%c16, %c0_29, %c0_30] : memref<30x8x128xf32, #tpu.memory_space<vmem>>, vector<1x8x128xf32>
    %44 = vector.shape_cast %43 : vector<1x8x128xf32> to vector<8x128xf32>
    %c16_31 = arith.constant 16 : index
    %c0_32 = arith.constant 0 : index
    %c0_33 = arith.constant 0 : index
    %45 = vector.load %arg1[%c16_31, %c0_32, %c0_33] : memref<30x8x128xf32, #tpu.memory_space<vmem>>, vector<1x8x128xf32>
    %46 = vector.shape_cast %45 : vector<1x8x128xf32> to vector<8x128xf32>
    %47 = arith.subf %44, %46 : vector<8x128xf32>
    %48 = arith.mulf %47, %47 : vector<8x128xf32>
    %49 = arith.addf %42, %48 : vector<8x128xf32>
    %c17 = arith.constant 17 : index
    %c0_34 = arith.constant 0 : index
    %c0_35 = arith.constant 0 : index
    %50 = vector.load %arg2[%c17, %c0_34, %c0_35] : memref<30x8x128xf32, #tpu.memory_space<vmem>>, vector<1x8x128xf32>
    %51 = vector.shape_cast %50 : vector<1x8x128xf32> to vector<8x128xf32>
    %c17_36 = arith.constant 17 : index
    %c0_37 = arith.constant 0 : index
    %c0_38 = arith.constant 0 : index
    %52 = vector.load %arg1[%c17_36, %c0_37, %c0_38] : memref<30x8x128xf32, #tpu.memory_space<vmem>>, vector<1x8x128xf32>
    %53 = vector.shape_cast %52 : vector<1x8x128xf32> to vector<8x128xf32>
    %54 = arith.subf %51, %53 : vector<8x128xf32>
    %55 = arith.mulf %54, %54 : vector<8x128xf32>
    %56 = arith.addf %49, %55 : vector<8x128xf32>
    %c18 = arith.constant 18 : index
    %c0_39 = arith.constant 0 : index
    %c0_40 = arith.constant 0 : index
    %57 = vector.load %arg2[%c18, %c0_39, %c0_40] : memref<30x8x128xf32, #tpu.memory_space<vmem>>, vector<1x8x128xf32>
    %58 = vector.shape_cast %57 : vector<1x8x128xf32> to vector<8x128xf32>
    %c18_41 = arith.constant 18 : index
    %c0_42 = arith.constant 0 : index
    %c0_43 = arith.constant 0 : index
    %59 = vector.load %arg1[%c18_41, %c0_42, %c0_43] : memref<30x8x128xf32, #tpu.memory_space<vmem>>, vector<1x8x128xf32>
    %60 = vector.shape_cast %59 : vector<1x8x128xf32> to vector<8x128xf32>
    %61 = arith.subf %58, %60 : vector<8x128xf32>
    %62 = arith.mulf %61, %61 : vector<8x128xf32>
    %63 = arith.addf %56, %62 : vector<8x128xf32>
    %c19 = arith.constant 19 : index
    %c0_44 = arith.constant 0 : index
    %c0_45 = arith.constant 0 : index
    %64 = vector.load %arg2[%c19, %c0_44, %c0_45] : memref<30x8x128xf32, #tpu.memory_space<vmem>>, vector<1x8x128xf32>
    %65 = vector.shape_cast %64 : vector<1x8x128xf32> to vector<8x128xf32>
    %c19_46 = arith.constant 19 : index
    %c0_47 = arith.constant 0 : index
    %c0_48 = arith.constant 0 : index
    %66 = vector.load %arg1[%c19_46, %c0_47, %c0_48] : memref<30x8x128xf32, #tpu.memory_space<vmem>>, vector<1x8x128xf32>
    %67 = vector.shape_cast %66 : vector<1x8x128xf32> to vector<8x128xf32>
    %68 = arith.subf %65, %67 : vector<8x128xf32>
    %69 = arith.mulf %68, %68 : vector<8x128xf32>
    %70 = arith.addf %63, %69 : vector<8x128xf32>
    %c20 = arith.constant 20 : index
    %c0_49 = arith.constant 0 : index
    %c0_50 = arith.constant 0 : index
    %71 = vector.load %arg2[%c20, %c0_49, %c0_50] : memref<30x8x128xf32, #tpu.memory_space<vmem>>, vector<1x8x128xf32>
    %72 = vector.shape_cast %71 : vector<1x8x128xf32> to vector<8x128xf32>
    %c20_51 = arith.constant 20 : index
    %c0_52 = arith.constant 0 : index
    %c0_53 = arith.constant 0 : index
    %73 = vector.load %arg1[%c20_51, %c0_52, %c0_53] : memref<30x8x128xf32, #tpu.memory_space<vmem>>, vector<1x8x128xf32>
    %74 = vector.shape_cast %73 : vector<1x8x128xf32> to vector<8x128xf32>
    %75 = arith.subf %72, %74 : vector<8x128xf32>
    %76 = arith.mulf %75, %75 : vector<8x128xf32>
    %77 = arith.addf %70, %76 : vector<8x128xf32>
    %c21 = arith.constant 21 : index
    %c0_54 = arith.constant 0 : index
    %c0_55 = arith.constant 0 : index
    %78 = vector.load %arg2[%c21, %c0_54, %c0_55] : memref<30x8x128xf32, #tpu.memory_space<vmem>>, vector<1x8x128xf32>
    %79 = vector.shape_cast %78 : vector<1x8x128xf32> to vector<8x128xf32>
    %c21_56 = arith.constant 21 : index
    %c0_57 = arith.constant 0 : index
    %c0_58 = arith.constant 0 : index
    %80 = vector.load %arg1[%c21_56, %c0_57, %c0_58] : memref<30x8x128xf32, #tpu.memory_space<vmem>>, vector<1x8x128xf32>
    %81 = vector.shape_cast %80 : vector<1x8x128xf32> to vector<8x128xf32>
    %82 = arith.subf %79, %81 : vector<8x128xf32>
    %83 = arith.mulf %82, %82 : vector<8x128xf32>
    %84 = arith.addf %77, %83 : vector<8x128xf32>
    %c22 = arith.constant 22 : index
    %c0_59 = arith.constant 0 : index
    %c0_60 = arith.constant 0 : index
    %85 = vector.load %arg2[%c22, %c0_59, %c0_60] : memref<30x8x128xf32, #tpu.memory_space<vmem>>, vector<1x8x128xf32>
    %86 = vector.shape_cast %85 : vector<1x8x128xf32> to vector<8x128xf32>
    %c22_61 = arith.constant 22 : index
    %c0_62 = arith.constant 0 : index
    %c0_63 = arith.constant 0 : index
    %87 = vector.load %arg1[%c22_61, %c0_62, %c0_63] : memref<30x8x128xf32, #tpu.memory_space<vmem>>, vector<1x8x128xf32>
    %88 = vector.shape_cast %87 : vector<1x8x128xf32> to vector<8x128xf32>
    %89 = arith.subf %86, %88 : vector<8x128xf32>
    %90 = arith.mulf %89, %89 : vector<8x128xf32>
    %91 = arith.addf %84, %90 : vector<8x128xf32>
    %c23 = arith.constant 23 : index
    %c0_64 = arith.constant 0 : index
    %c0_65 = arith.constant 0 : index
    %92 = vector.load %arg2[%c23, %c0_64, %c0_65] : memref<30x8x128xf32, #tpu.memory_space<vmem>>, vector<1x8x128xf32>
    %93 = vector.shape_cast %92 : vector<1x8x128xf32> to vector<8x128xf32>
    %c23_66 = arith.constant 23 : index
    %c0_67 = arith.constant 0 : index
    %c0_68 = arith.constant 0 : index
    %94 = vector.load %arg1[%c23_66, %c0_67, %c0_68] : memref<30x8x128xf32, #tpu.memory_space<vmem>>, vector<1x8x128xf32>
    %95 = vector.shape_cast %94 : vector<1x8x128xf32> to vector<8x128xf32>
    %96 = arith.subf %93, %95 : vector<8x128xf32>
    %97 = arith.mulf %96, %96 : vector<8x128xf32>
    %98 = arith.addf %91, %97 : vector<8x128xf32>
    %c24 = arith.constant 24 : index
    %c0_69 = arith.constant 0 : index
    %c0_70 = arith.constant 0 : index
    %99 = vector.load %arg2[%c24, %c0_69, %c0_70] : memref<30x8x128xf32, #tpu.memory_space<vmem>>, vector<1x8x128xf32>
    %100 = vector.shape_cast %99 : vector<1x8x128xf32> to vector<8x128xf32>
    %c24_71 = arith.constant 24 : index
    %c0_72 = arith.constant 0 : index
    %c0_73 = arith.constant 0 : index
    %101 = vector.load %arg1[%c24_71, %c0_72, %c0_73] : memref<30x8x128xf32, #tpu.memory_space<vmem>>, vector<1x8x128xf32>
    %102 = vector.shape_cast %101 : vector<1x8x128xf32> to vector<8x128xf32>
    %103 = arith.subf %100, %102 : vector<8x128xf32>
    %104 = arith.mulf %103, %103 : vector<8x128xf32>
    %105 = arith.addf %98, %104 : vector<8x128xf32>
    %c25 = arith.constant 25 : index
    %c0_74 = arith.constant 0 : index
    %c0_75 = arith.constant 0 : index
    %106 = vector.load %arg2[%c25, %c0_74, %c0_75] : memref<30x8x128xf32, #tpu.memory_space<vmem>>, vector<1x8x128xf32>
    %107 = vector.shape_cast %106 : vector<1x8x128xf32> to vector<8x128xf32>
    %c25_76 = arith.constant 25 : index
    %c0_77 = arith.constant 0 : index
    %c0_78 = arith.constant 0 : index
    %108 = vector.load %arg1[%c25_76, %c0_77, %c0_78] : memref<30x8x128xf32, #tpu.memory_space<vmem>>, vector<1x8x128xf32>
    %109 = vector.shape_cast %108 : vector<1x8x128xf32> to vector<8x128xf32>
    %110 = arith.subf %107, %109 : vector<8x128xf32>
    %111 = arith.mulf %110, %110 : vector<8x128xf32>
    %112 = arith.addf %105, %111 : vector<8x128xf32>
    %c26 = arith.constant 26 : index
    %c0_79 = arith.constant 0 : index
    %c0_80 = arith.constant 0 : index
    %113 = vector.load %arg2[%c26, %c0_79, %c0_80] : memref<30x8x128xf32, #tpu.memory_space<vmem>>, vector<1x8x128xf32>
    %114 = vector.shape_cast %113 : vector<1x8x128xf32> to vector<8x128xf32>
    %c26_81 = arith.constant 26 : index
    %c0_82 = arith.constant 0 : index
    %c0_83 = arith.constant 0 : index
    %115 = vector.load %arg1[%c26_81, %c0_82, %c0_83] : memref<30x8x128xf32, #tpu.memory_space<vmem>>, vector<1x8x128xf32>
    %116 = vector.shape_cast %115 : vector<1x8x128xf32> to vector<8x128xf32>
    %117 = arith.subf %114, %116 : vector<8x128xf32>
    %118 = arith.mulf %117, %117 : vector<8x128xf32>
    %119 = arith.addf %112, %118 : vector<8x128xf32>
    %c27 = arith.constant 27 : index
    %c0_84 = arith.constant 0 : index
    %c0_85 = arith.constant 0 : index
    %120 = vector.load %arg2[%c27, %c0_84, %c0_85] : memref<30x8x128xf32, #tpu.memory_space<vmem>>, vector<1x8x128xf32>
    %121 = vector.shape_cast %120 : vector<1x8x128xf32> to vector<8x128xf32>
    %c27_86 = arith.constant 27 : index
    %c0_87 = arith.constant 0 : index
    %c0_88 = arith.constant 0 : index
    %122 = vector.load %arg1[%c27_86, %c0_87, %c0_88] : memref<30x8x128xf32, #tpu.memory_space<vmem>>, vector<1x8x128xf32>
    %123 = vector.shape_cast %122 : vector<1x8x128xf32> to vector<8x128xf32>
    %124 = arith.subf %121, %123 : vector<8x128xf32>
    %125 = arith.mulf %124, %124 : vector<8x128xf32>
    %126 = arith.addf %119, %125 : vector<8x128xf32>
    %c28 = arith.constant 28 : index
    %c0_89 = arith.constant 0 : index
    %c0_90 = arith.constant 0 : index
    %127 = vector.load %arg2[%c28, %c0_89, %c0_90] : memref<30x8x128xf32, #tpu.memory_space<vmem>>, vector<1x8x128xf32>
    %128 = vector.shape_cast %127 : vector<1x8x128xf32> to vector<8x128xf32>
    %c28_91 = arith.constant 28 : index
    %c0_92 = arith.constant 0 : index
    %c0_93 = arith.constant 0 : index
    %129 = vector.load %arg1[%c28_91, %c0_92, %c0_93] : memref<30x8x128xf32, #tpu.memory_space<vmem>>, vector<1x8x128xf32>
    %130 = vector.shape_cast %129 : vector<1x8x128xf32> to vector<8x128xf32>
    %131 = arith.subf %128, %130 : vector<8x128xf32>
    %132 = arith.mulf %131, %131 : vector<8x128xf32>
    %133 = arith.addf %126, %132 : vector<8x128xf32>
    %c29 = arith.constant 29 : index
    %c0_94 = arith.constant 0 : index
    %c0_95 = arith.constant 0 : index
    %134 = vector.load %arg2[%c29, %c0_94, %c0_95] : memref<30x8x128xf32, #tpu.memory_space<vmem>>, vector<1x8x128xf32>
    %135 = vector.shape_cast %134 : vector<1x8x128xf32> to vector<8x128xf32>
    %c29_96 = arith.constant 29 : index
    %c0_97 = arith.constant 0 : index
    %c0_98 = arith.constant 0 : index
    %136 = vector.load %arg1[%c29_96, %c0_97, %c0_98] : memref<30x8x128xf32, #tpu.memory_space<vmem>>, vector<1x8x128xf32>
    %137 = vector.shape_cast %136 : vector<1x8x128xf32> to vector<8x128xf32>
    %138 = arith.subf %135, %137 : vector<8x128xf32>
    %139 = arith.mulf %138, %138 : vector<8x128xf32>
    %140 = arith.addf %133, %139 : vector<8x128xf32>
    %c0_99 = arith.constant 0 : index
    %c0_100 = arith.constant 0 : index
    %c0_101 = arith.constant 0 : index
    %141 = vector.load %arg2[%c0_99, %c0_100, %c0_101] : memref<30x8x128xf32, #tpu.memory_space<vmem>>, vector<1x8x128xf32>
    %142 = vector.shape_cast %141 : vector<1x8x128xf32> to vector<8x128xf32>
    %c1 = arith.constant 1 : index
    %c0_102 = arith.constant 0 : index
    %c0_103 = arith.constant 0 : index
    %143 = vector.load %arg2[%c1, %c0_102, %c0_103] : memref<30x8x128xf32, #tpu.memory_space<vmem>>, vector<1x8x128xf32>
    %144 = vector.shape_cast %143 : vector<1x8x128xf32> to vector<8x128xf32>
    %c2 = arith.constant 2 : index
    %c0_104 = arith.constant 0 : index
    %c0_105 = arith.constant 0 : index
    %145 = vector.load %arg2[%c2, %c0_104, %c0_105] : memref<30x8x128xf32, #tpu.memory_space<vmem>>, vector<1x8x128xf32>
    %146 = vector.shape_cast %145 : vector<1x8x128xf32> to vector<8x128xf32>
    %c3 = arith.constant 3 : index
    %c0_106 = arith.constant 0 : index
    %c0_107 = arith.constant 0 : index
    %147 = vector.load %arg2[%c3, %c0_106, %c0_107] : memref<30x8x128xf32, #tpu.memory_space<vmem>>, vector<1x8x128xf32>
    %148 = vector.shape_cast %147 : vector<1x8x128xf32> to vector<8x128xf32>
    %c0_108 = arith.constant 0 : index
    %c0_109 = arith.constant 0 : index
    %c0_110 = arith.constant 0 : index
    %149 = vector.load %arg1[%c0_108, %c0_109, %c0_110] : memref<30x8x128xf32, #tpu.memory_space<vmem>>, vector<1x8x128xf32>
    %150 = vector.shape_cast %149 : vector<1x8x128xf32> to vector<8x128xf32>
    %c1_111 = arith.constant 1 : index
    %c0_112 = arith.constant 0 : index
    %c0_113 = arith.constant 0 : index
    %151 = vector.load %arg1[%c1_111, %c0_112, %c0_113] : memref<30x8x128xf32, #tpu.memory_space<vmem>>, vector<1x8x128xf32>
    %152 = vector.shape_cast %151 : vector<1x8x128xf32> to vector<8x128xf32>
    %c2_114 = arith.constant 2 : index
    %c0_115 = arith.constant 0 : index
    %c0_116 = arith.constant 0 : index
    %153 = vector.load %arg1[%c2_114, %c0_115, %c0_116] : memref<30x8x128xf32, #tpu.memory_space<vmem>>, vector<1x8x128xf32>
    %154 = vector.shape_cast %153 : vector<1x8x128xf32> to vector<8x128xf32>
    %c3_117 = arith.constant 3 : index
    %c0_118 = arith.constant 0 : index
    %c0_119 = arith.constant 0 : index
    %155 = vector.load %arg1[%c3_117, %c0_118, %c0_119] : memref<30x8x128xf32, #tpu.memory_space<vmem>>, vector<1x8x128xf32>
    %156 = vector.shape_cast %155 : vector<1x8x128xf32> to vector<8x128xf32>
    %c4 = arith.constant 4 : index
    %c0_120 = arith.constant 0 : index
    %c0_121 = arith.constant 0 : index
    %157 = vector.load %arg1[%c4, %c0_120, %c0_121] : memref<30x8x128xf32, #tpu.memory_space<vmem>>, vector<1x8x128xf32>
    %158 = vector.shape_cast %157 : vector<1x8x128xf32> to vector<8x128xf32>
    %c5 = arith.constant 5 : index
    %c0_122 = arith.constant 0 : index
    %c0_123 = arith.constant 0 : index
    %159 = vector.load %arg1[%c5, %c0_122, %c0_123] : memref<30x8x128xf32, #tpu.memory_space<vmem>>, vector<1x8x128xf32>
    %160 = vector.shape_cast %159 : vector<1x8x128xf32> to vector<8x128xf32>
    %c6 = arith.constant 6 : index
    %c0_124 = arith.constant 0 : index
    %c0_125 = arith.constant 0 : index
    %161 = vector.load %arg1[%c6, %c0_124, %c0_125] : memref<30x8x128xf32, #tpu.memory_space<vmem>>, vector<1x8x128xf32>
    %162 = vector.shape_cast %161 : vector<1x8x128xf32> to vector<8x128xf32>
    %c7 = arith.constant 7 : index
    %c0_126 = arith.constant 0 : index
    %c0_127 = arith.constant 0 : index
    %163 = vector.load %arg1[%c7, %c0_126, %c0_127] : memref<30x8x128xf32, #tpu.memory_space<vmem>>, vector<1x8x128xf32>
    %164 = vector.shape_cast %163 : vector<1x8x128xf32> to vector<8x128xf32>
    %c8 = arith.constant 8 : index
    %c0_128 = arith.constant 0 : index
    %c0_129 = arith.constant 0 : index
    %165 = vector.load %arg1[%c8, %c0_128, %c0_129] : memref<30x8x128xf32, #tpu.memory_space<vmem>>, vector<1x8x128xf32>
    %166 = vector.shape_cast %165 : vector<1x8x128xf32> to vector<8x128xf32>
    %c9 = arith.constant 9 : index
    %c0_130 = arith.constant 0 : index
    %c0_131 = arith.constant 0 : index
    %167 = vector.load %arg1[%c9, %c0_130, %c0_131] : memref<30x8x128xf32, #tpu.memory_space<vmem>>, vector<1x8x128xf32>
    %168 = vector.shape_cast %167 : vector<1x8x128xf32> to vector<8x128xf32>
    %cst_132 = arith.constant 5.000000e-01 : f32
    %169 = vector.broadcast %cst_132 : f32 to vector<8x128xf32>
    %170 = arith.mulf %169, %154 : vector<8x128xf32>
    %171 = arith.addf %150, %170 : vector<8x128xf32>
    %cst_133 = arith.constant 5.000000e-01 : f32
    %172 = vector.broadcast %cst_133 : f32 to vector<8x128xf32>
    %173 = arith.mulf %172, %146 : vector<8x128xf32>
    %174 = arith.addf %142, %173 : vector<8x128xf32>
    %175 = arith.minimumf %171, %174 : vector<8x128xf32>
    %cst_134 = arith.constant 5.000000e-01 : f32
    %176 = vector.broadcast %cst_134 : f32 to vector<8x128xf32>
    %177 = arith.mulf %176, %154 : vector<8x128xf32>
    %178 = arith.subf %150, %177 : vector<8x128xf32>
    %cst_135 = arith.constant 5.000000e-01 : f32
    %179 = vector.broadcast %cst_135 : f32 to vector<8x128xf32>
    %180 = arith.mulf %179, %146 : vector<8x128xf32>
    %181 = arith.subf %142, %180 : vector<8x128xf32>
    %182 = arith.maximumf %178, %181 : vector<8x128xf32>
    %183 = arith.subf %175, %182 : vector<8x128xf32>
    %cst_136 = arith.constant 5.000000e-01 : f32
    %184 = vector.broadcast %cst_136 : f32 to vector<8x128xf32>
    %185 = arith.mulf %184, %156 : vector<8x128xf32>
    %186 = arith.addf %152, %185 : vector<8x128xf32>
    %cst_137 = arith.constant 5.000000e-01 : f32
    %187 = vector.broadcast %cst_137 : f32 to vector<8x128xf32>
    %188 = arith.mulf %187, %148 : vector<8x128xf32>
    %189 = arith.addf %144, %188 : vector<8x128xf32>
    %190 = arith.minimumf %186, %189 : vector<8x128xf32>
    %cst_138 = arith.constant 5.000000e-01 : f32
    %191 = vector.broadcast %cst_138 : f32 to vector<8x128xf32>
    %192 = arith.mulf %191, %156 : vector<8x128xf32>
    %193 = arith.subf %152, %192 : vector<8x128xf32>
    %cst_139 = arith.constant 5.000000e-01 : f32
    %194 = vector.broadcast %cst_139 : f32 to vector<8x128xf32>
    %195 = arith.mulf %194, %148 : vector<8x128xf32>
    %196 = arith.subf %144, %195 : vector<8x128xf32>
    %197 = arith.maximumf %193, %196 : vector<8x128xf32>
    %198 = arith.subf %190, %197 : vector<8x128xf32>
    %cst_140 = arith.constant 0.000000e+00 : f32
    %199 = vector.broadcast %cst_140 : f32 to vector<8x128xf32>
    %200 = arith.maximumf %183, %199 : vector<8x128xf32>
    %cst_141 = arith.constant 0.000000e+00 : f32
    %201 = vector.broadcast %cst_141 : f32 to vector<8x128xf32>
    %202 = arith.maximumf %198, %201 : vector<8x128xf32>
    %203 = arith.mulf %200, %202 : vector<8x128xf32>
    %204 = arith.mulf %154, %156 : vector<8x128xf32>
    %205 = arith.mulf %146, %148 : vector<8x128xf32>
    %206 = arith.addf %204, %205 : vector<8x128xf32>
    %207 = arith.subf %206, %203 : vector<8x128xf32>
    %cst_142 = arith.constant 1.000000e-30 : f32
    %208 = vector.broadcast %cst_142 : f32 to vector<8x128xf32>
    %209 = arith.maximumf %207, %208 : vector<8x128xf32>
    %210 = arith.divf %203, %209 : vector<8x128xf32>
    %cst_143 = arith.constant 5.000000e-01 : f32
    %211 = vector.broadcast %cst_143 : f32 to vector<8x128xf32>
    %212 = arith.mulf %211, %164 : vector<8x128xf32>
    %213 = arith.addf %160, %212 : vector<8x128xf32>
    %cst_144 = arith.constant 5.000000e-01 : f32
    %214 = vector.broadcast %cst_144 : f32 to vector<8x128xf32>
    %215 = arith.mulf %214, %146 : vector<8x128xf32>
    %216 = arith.addf %142, %215 : vector<8x128xf32>
    %217 = arith.minimumf %213, %216 : vector<8x128xf32>
    %cst_145 = arith.constant 5.000000e-01 : f32
    %218 = vector.broadcast %cst_145 : f32 to vector<8x128xf32>
    %219 = arith.mulf %218, %164 : vector<8x128xf32>
    %220 = arith.subf %160, %219 : vector<8x128xf32>
    %cst_146 = arith.constant 5.000000e-01 : f32
    %221 = vector.broadcast %cst_146 : f32 to vector<8x128xf32>
    %222 = arith.mulf %221, %146 : vector<8x128xf32>
    %223 = arith.subf %142, %222 : vector<8x128xf32>
    %224 = arith.maximumf %220, %223 : vector<8x128xf32>
    %225 = arith.subf %217, %224 : vector<8x128xf32>
    %cst_147 = arith.constant 5.000000e-01 : f32
    %226 = vector.broadcast %cst_147 : f32 to vector<8x128xf32>
    %227 = arith.mulf %226, %166 : vector<8x128xf32>
    %228 = arith.addf %162, %227 : vector<8x128xf32>
    %cst_148 = arith.constant 5.000000e-01 : f32
    %229 = vector.broadcast %cst_148 : f32 to vector<8x128xf32>
    %230 = arith.mulf %229, %148 : vector<8x128xf32>
    %231 = arith.addf %144, %230 : vector<8x128xf32>
    %232 = arith.minimumf %228, %231 : vector<8x128xf32>
    %cst_149 = arith.constant 5.000000e-01 : f32
    %233 = vector.broadcast %cst_149 : f32 to vector<8x128xf32>
    %234 = arith.mulf %233, %166 : vector<8x128xf32>
    %235 = arith.subf %162, %234 : vector<8x128xf32>
    %cst_150 = arith.constant 5.000000e-01 : f32
    %236 = vector.broadcast %cst_150 : f32 to vector<8x128xf32>
    %237 = arith.mulf %236, %148 : vector<8x128xf32>
    %238 = arith.subf %144, %237 : vector<8x128xf32>
    %239 = arith.maximumf %235, %238 : vector<8x128xf32>
    %240 = arith.subf %232, %239 : vector<8x128xf32>
    %cst_151 = arith.constant 0.000000e+00 : f32
    %241 = vector.broadcast %cst_151 : f32 to vector<8x128xf32>
    %242 = arith.maximumf %225, %241 : vector<8x128xf32>
    %cst_152 = arith.constant 0.000000e+00 : f32
    %243 = vector.broadcast %cst_152 : f32 to vector<8x128xf32>
    %244 = arith.maximumf %240, %243 : vector<8x128xf32>
    %245 = arith.mulf %242, %244 : vector<8x128xf32>
    %246 = arith.mulf %164, %166 : vector<8x128xf32>
    %247 = arith.mulf %146, %148 : vector<8x128xf32>
    %248 = arith.addf %246, %247 : vector<8x128xf32>
    %249 = arith.subf %248, %245 : vector<8x128xf32>
    %cst_153 = arith.constant 1.000000e-30 : f32
    %250 = vector.broadcast %cst_153 : f32 to vector<8x128xf32>
    %251 = arith.maximumf %249, %250 : vector<8x128xf32>
    %252 = arith.divf %245, %251 : vector<8x128xf32>
    %253 = arith.cmpf ogt, %210, %252 : vector<8x128xf32>
    %254 = arith.mulf %158, %158 : vector<8x128xf32>
    %cst_154 = arith.constant 5.000000e-01 : f32
    %255 = vector.broadcast %cst_154 : f32 to vector<8x128xf32>
    %256 = arith.mulf %255, %254 : vector<8x128xf32>
    %257 = arith.mulf %168, %168 : vector<8x128xf32>
    %cst_155 = arith.constant 5.000000e-01 : f32
    %258 = vector.broadcast %cst_155 : f32 to vector<8x128xf32>
    %259 = arith.mulf %258, %257 : vector<8x128xf32>
    %260 = arith.subf %142, %150 : vector<8x128xf32>
    %261 = arith.mulf %260, %260 : vector<8x128xf32>
    %262 = arith.subf %144, %152 : vector<8x128xf32>
    %263 = arith.mulf %262, %262 : vector<8x128xf32>
    %264 = arith.addf %261, %263 : vector<8x128xf32>
    %cst_156 = arith.constant 5.000000e+00 : f32
    %265 = vector.broadcast %cst_156 : f32 to vector<8x128xf32>
    %266 = arith.mulf %265, %264 : vector<8x128xf32>
    %267 = math.sqrt %146 : vector<8x128xf32>
    %268 = math.sqrt %154 : vector<8x128xf32>
    %269 = arith.subf %267, %268 : vector<8x128xf32>
    %270 = arith.mulf %269, %269 : vector<8x128xf32>
    %271 = math.sqrt %148 : vector<8x128xf32>
    %272 = math.sqrt %156 : vector<8x128xf32>
    %273 = arith.subf %271, %272 : vector<8x128xf32>
    %274 = arith.mulf %273, %273 : vector<8x128xf32>
    %275 = arith.addf %270, %274 : vector<8x128xf32>
    %cst_157 = arith.constant 5.000000e+00 : f32
    %276 = vector.broadcast %cst_157 : f32 to vector<8x128xf32>
    %277 = arith.mulf %276, %275 : vector<8x128xf32>
    %278 = arith.addf %266, %277 : vector<8x128xf32>
    %279 = arith.subf %158, %210 : vector<8x128xf32>
    %280 = arith.mulf %279, %279 : vector<8x128xf32>
    %281 = arith.addf %278, %280 : vector<8x128xf32>
    %282 = arith.addf %281, %259 : vector<8x128xf32>
    %c5_158 = arith.constant 5 : index
    %c0_159 = arith.constant 0 : index
    %c0_160 = arith.constant 0 : index
    %283 = vector.load %arg2[%c5_158, %c0_159, %c0_160] : memref<30x8x128xf32, #tpu.memory_space<vmem>>, vector<1x8x128xf32>
    %284 = vector.shape_cast %283 : vector<1x8x128xf32> to vector<8x128xf32>
    %285 = arith.subf %284, %160 : vector<8x128xf32>
    %286 = arith.mulf %285, %285 : vector<8x128xf32>
    %c6_161 = arith.constant 6 : index
    %c0_162 = arith.constant 0 : index
    %c0_163 = arith.constant 0 : index
    %287 = vector.load %arg2[%c6_161, %c0_162, %c0_163] : memref<30x8x128xf32, #tpu.memory_space<vmem>>, vector<1x8x128xf32>
    %288 = vector.shape_cast %287 : vector<1x8x128xf32> to vector<8x128xf32>
    %289 = arith.subf %288, %162 : vector<8x128xf32>
    %290 = arith.mulf %289, %289 : vector<8x128xf32>
    %291 = arith.addf %286, %290 : vector<8x128xf32>
    %cst_164 = arith.constant 5.000000e+00 : f32
    %292 = vector.broadcast %cst_164 : f32 to vector<8x128xf32>
    %293 = arith.mulf %292, %291 : vector<8x128xf32>
    %c7_165 = arith.constant 7 : index
    %c0_166 = arith.constant 0 : index
    %c0_167 = arith.constant 0 : index
    %294 = vector.load %arg2[%c7_165, %c0_166, %c0_167] : memref<30x8x128xf32, #tpu.memory_space<vmem>>, vector<1x8x128xf32>
    %295 = vector.shape_cast %294 : vector<1x8x128xf32> to vector<8x128xf32>
    %296 = math.sqrt %295 : vector<8x128xf32>
    %297 = math.sqrt %164 : vector<8x128xf32>
    %298 = arith.subf %296, %297 : vector<8x128xf32>
    %299 = arith.mulf %298, %298 : vector<8x128xf32>
    %c8_168 = arith.constant 8 : index
    %c0_169 = arith.constant 0 : index
    %c0_170 = arith.constant 0 : index
    %300 = vector.load %arg2[%c8_168, %c0_169, %c0_170] : memref<30x8x128xf32, #tpu.memory_space<vmem>>, vector<1x8x128xf32>
    %301 = vector.shape_cast %300 : vector<1x8x128xf32> to vector<8x128xf32>
    %302 = math.sqrt %301 : vector<8x128xf32>
    %303 = math.sqrt %166 : vector<8x128xf32>
    %304 = arith.subf %302, %303 : vector<8x128xf32>
    %305 = arith.mulf %304, %304 : vector<8x128xf32>
    %306 = arith.addf %299, %305 : vector<8x128xf32>
    %cst_171 = arith.constant 5.000000e+00 : f32
    %307 = vector.broadcast %cst_171 : f32 to vector<8x128xf32>
    %308 = arith.mulf %307, %306 : vector<8x128xf32>
    %309 = arith.addf %293, %308 : vector<8x128xf32>
    %310 = arith.subf %168, %252 : vector<8x128xf32>
    %311 = arith.mulf %310, %310 : vector<8x128xf32>
    %312 = arith.addf %309, %311 : vector<8x128xf32>
    %313 = arith.addf %312, %256 : vector<8x128xf32>
    %c4_172 = arith.constant 4 : index
    %c0_173 = arith.constant 0 : index
    %c0_174 = arith.constant 0 : index
    %314 = vector.load %arg2[%c4_172, %c0_173, %c0_174] : memref<30x8x128xf32, #tpu.memory_space<vmem>>, vector<1x8x128xf32>
    %315 = vector.shape_cast %314 : vector<1x8x128xf32> to vector<8x128xf32>
    %cst_175 = arith.constant 1.000000e+00 : f32
    %316 = vector.broadcast %cst_175 : f32 to vector<8x128xf32>
    %317 = arith.cmpf oeq, %315, %316 : vector<8x128xf32>
    %318 = arith.select %253, %282, %313 : vector<8x128xi1>, vector<8x128xf32>
    %319 = arith.addf %318, %140 : vector<8x128xf32>
    %320 = arith.addf %256, %259 : vector<8x128xf32>
    %321 = arith.select %317, %319, %320 : vector<8x128xi1>, vector<8x128xf32>
    %c0_176 = arith.constant 0 : index
    %c0_177 = arith.constant 0 : index
    %c0_178 = arith.constant 0 : index
    %322 = vector.load %arg3[%c0_176, %c0_177, %c0_178] : memref<1x8x128xf32, #tpu.memory_space<vmem>>, vector<1x8x128xf32>
    %323 = vector.shape_cast %322 : vector<1x8x128xf32> to vector<8x128xf32>
    %324 = vector.shape_cast %321 : vector<8x128xf32> to vector<1x8x128xf32>
    tpu.vector_store %arg3[%c0_176, %c0_177, %c0_178], %324 {strides = array<i32>} : memref<1x8x128xf32, #tpu.memory_space<vmem>>, vector<1x8x128xf32>,
    return
  }
  func.func @transform_0(%arg0: i32) -> (i32, i32, i32) {
    %c0_i32 = arith.constant 0 : i32
    %c0_i32_0 = arith.constant 0 : i32
    %c0_i32_1 = arith.constant 0 : i32
    return %c0_i32, %arg0, %c0_i32_0 : i32, i32, i32
  }
  func.func @transform_1(%arg0: i32) -> (i32, i32, i32) {
    %c0_i32 = arith.constant 0 : i32
    %c0_i32_0 = arith.constant 0 : i32
    %c0_i32_1 = arith.constant 0 : i32
    return %c0_i32, %arg0, %c0_i32_0 : i32, i32, i32
  }
  func.func @transform_2(%arg0: i32) -> (i32, i32, i32) {
    %c0_i32 = arith.constant 0 : i32
    %c0_i32_0 = arith.constant 0 : i32
    %c0_i32_1 = arith.constant 0 : i32
    return %arg0, %c0_i32, %c0_i32_0 : i32, i32, i32
  }
}

</mosaic_0001>

<llo_original>
// kernel: tpu_custom_call.1
$region0: #{tpu_custom_call.1}
  #allocation0 [shape = 'u32[]', space=smem, size = 0x4, offset = 0x4, fixed_abs, tag = 'smem constant byte address 0x4 - core index']
  #allocation1 [shape = 'u32[72,128]{1,0:T(1,128)}', space=vmem, size = 0x9000, scoped, tag = 'internal scratch']
  %s0 = inlined_call_operand.vmem [shape: f32[512,30], index: 0, kind: input, shape index: {}]
  %s1 = inlined_call_operand.vmem [shape: f32[512,30], index: 1, kind: input, shape index: {}]
  %s2 = inlined_call_operand.hbm [shape: f32[1,1,512], index: 2, kind: output, shape index: {}]
  %s3 = sld [smem:[#allocation0]]
  $region18: #{tpu_custom_call.1} parent=0
    _
  %s5 = ssub.s32 1, %s3
  %s6 = scalar_select 0, %s5, %s3
  $region1: #{tpu_custom_call.1} parent=0
    #allocation2 [shape = 'u8[2048]{0}', space=vmem, size = 0x800, scoped, tag = 'output window, operand 0, single buffered']
    #allocation3 [shape = 's32[1]{0}', space=sflag, size = 0x4, scoped, tag = 'scoped memory for tpu_custom_call.1']
    %7 = vsyncpa [#allocation3], 0
    // Predicated region
    $region2: #{tpu_custom_call.1} parent=1 // pred_check
      _
    $region3: #{tpu_custom_call.1} parent=1 // pred_check_branch
      %9 = sbr.rel (0) target = $region5
    $region4: #{tpu_custom_call.1} parent=1 // pred_region
      _
    $region5: #{tpu_custom_call.1} parent=1 // pred_fallthru
      _
    // Predicated region
    $region6: #{tpu_custom_call.1} parent=1 // pred_check
      _
    $region7: #{tpu_custom_call.1} parent=1 // pred_check_branch
      %11 = sbr.rel (0) target = $region9
    $region8: #{tpu_custom_call.1} parent=1 // pred_region
      _
    $region9: #{tpu_custom_call.1} parent=1 // pred_fallthru
      _
    %s12 = smul.u32 0, 512
    %v13 = vlaneseq
    %v14 = vshrl.u32 %v13, 7
    %v15 = vadd.s32 %v14, 8
    %v16 = vadd.s32 %v14, 16
    %v17 = vadd.s32 %v14, 24
    %vm18 = vcmp.ge.s32.totalorder %v14, 10
    %vm19 = vcmp.ge.s32.totalorder %v15, 10
    %vm20 = vcmp.ge.s32.totalorder %v16, 10
    %vm21 = vcmp.ge.s32.totalorder %v17, 10
    %v22 = vlaneseq
    %v23 = vand.u32 %v22, 127
    %v24 = vadd.s32 %v23, 128
    %v25 = vadd.s32 %v23, 256
    %v26 = vadd.s32 %v23, 384
    %v27 = vld [vmem:[%s0] sm:$0xff]
    %v28 = vld [vmem:[%s0 + $0x8] sm:$0xff]
    %v29 = vld [vmem:[%s0 + $0x10] sm:$0xff]
    %v30 = vld [vmem:[%s0 + $0x18] sm:$0xff]
    %v31 = vld [vmem:[%s0 + $0x20] sm:$0xff]
    %v32 = vld [vmem:[%s0 + $0x28] sm:$0xff]
    %v33 = vld [vmem:[%s0 + $0x30] sm:$0xff]
    %v34 = vld [vmem:[%s0 + $0x38] sm:$0xff]
    %v35 = vld [vmem:[%s0 + $0x40] sm:$0xff]
    %v36 = vld [vmem:[%s0 + $0x48] sm:$0xff]
    %v37 = vld [vmem:[%s0 + $0x50] sm:$0xff]
    %v38 = vld [vmem:[%s0 + $0x58] sm:$0xff]
    %v39 = vld [vmem:[%s0 + $0x60] sm:$0xff]
    %v40 = vld [vmem:[%s0 + $0x68] sm:$0xff]
    %v41 = vld [vmem:[%s0 + $0x70] sm:$0xff]
    %v42 = vld [vmem:[%s0 + $0x78] sm:$0xff]
    %v43 = vld [vmem:[%s0 + $0x80] sm:$0xff]
    %v44 = vld [vmem:[%s0 + $0x88] sm:$0xff]
    %v45 = vld [vmem:[%s0 + $0x90] sm:$0xff]
    %v46 = vld [vmem:[%s0 + $0x98] sm:$0xff]
    %v47 = vld [vmem:[%s0 + $0xa0] sm:$0xff]
    %v48 = vld [vmem:[%s0 + $0xa8] sm:$0xff]
    %v49 = vld [vmem:[%s0 + $0xb0] sm:$0xff]
    %v50 = vld [vmem:[%s0 + $0xb8] sm:$0xff]
    %v51 = vld [vmem:[%s0 + $0xc0] sm:$0xff]
    %v52 = vld [vmem:[%s0 + $0xc8] sm:$0xff]
    %v53 = vld [vmem:[%s0 + $0xd0] sm:$0xff]
    %v54 = vld [vmem:[%s0 + $0xd8] sm:$0xff]
    %v55 = vld [vmem:[%s0 + $0xe0] sm:$0xff]
    %v56 = vld [vmem:[%s0 + $0xe8] sm:$0xff]
    %v57 = vld [vmem:[%s0 + $0xf0] sm:$0xff]
    %v58 = vld [vmem:[%s0 + $0xf8] sm:$0xff]
    %v59 = vld [vmem:[%s0 + $0x100] sm:$0xff]
    %v60 = vld [vmem:[%s0 + $0x108] sm:$0xff]
    %v61 = vld [vmem:[%s0 + $0x110] sm:$0xff]
    %v62 = vld [vmem:[%s0 + $0x118] sm:$0xff]
    %v63 = vld [vmem:[%s0 + $0x120] sm:$0xff]
    %v64 = vld [vmem:[%s0 + $0x128] sm:$0xff]
    %v65 = vld [vmem:[%s0 + $0x130] sm:$0xff]
    %v66 = vld [vmem:[%s0 + $0x138] sm:$0xff]
    %v67 = vld [vmem:[%s0 + $0x140] sm:$0xff]
    %v68 = vld [vmem:[%s0 + $0x148] sm:$0xff]
    %v69 = vld [vmem:[%s0 + $0x150] sm:$0xff]
    %v70 = vld [vmem:[%s0 + $0x158] sm:$0xff]
    %v71 = vld [vmem:[%s0 + $0x160] sm:$0xff]
    %v72 = vld [vmem:[%s0 + $0x168] sm:$0xff]
    %v73 = vld [vmem:[%s0 + $0x170] sm:$0xff]
    %v74 = vld [vmem:[%s0 + $0x178] sm:$0xff]
    %v75 = vld [vmem:[%s0 + $0x180] sm:$0xff]
    %v76 = vld [vmem:[%s0 + $0x188] sm:$0xff]
    %v77 = vld [vmem:[%s0 + $0x190] sm:$0xff]
    %v78 = vld [vmem:[%s0 + $0x198] sm:$0xff]
    %v79 = vld [vmem:[%s0 + $0x1a0] sm:$0xff]
    %v80 = vld [vmem:[%s0 + $0x1a8] sm:$0xff]
    %v81 = vld [vmem:[%s0 + $0x1b0] sm:$0xff]
    %v82 = vld [vmem:[%s0 + $0x1b8] sm:$0xff]
    %v83 = vld [vmem:[%s0 + $0x1c0] sm:$0xff]
    %v84 = vld [vmem:[%s0 + $0x1c8] sm:$0xff]
    %v85 = vld [vmem:[%s0 + $0x1d0] sm:$0xff]
    %v86 = vld [vmem:[%s0 + $0x1d8] sm:$0xff]
    %v87 = vld [vmem:[%s0 + $0x1e0] sm:$0xff]
    %v88 = vld [vmem:[%s0 + $0x1e8] sm:$0xff]
    %v89 = vld [vmem:[%s0 + $0x1f0] sm:$0xff]
    %v90 = vld [vmem:[%s0 + $0x1f8] sm:$0xff]
    %v91 = vld [vmem:[%s1] sm:$0xff]
    %v92 = vld [vmem:[%s1 + $0x8] sm:$0xff]
    %v93 = vld [vmem:[%s1 + $0x10] sm:$0xff]
    %v94 = vld [vmem:[%s1 + $0x18] sm:$0xff]
    %v95 = vld [vmem:[%s1 + $0x20] sm:$0xff]
    %v96 = vld [vmem:[%s1 + $0x28] sm:$0xff]
    %v97 = vld [vmem:[%s1 + $0x30] sm:$0xff]
    %v98 = vld [vmem:[%s1 + $0x38] sm:$0xff]
    %v99 = vld [vmem:[%s1 + $0x40] sm:$0xff]
    %v100 = vld [vmem:[%s1 + $0x48] sm:$0xff]
    %v101 = vld [vmem:[%s1 + $0x50] sm:$0xff]
    %v102 = vld [vmem:[%s1 + $0x58] sm:$0xff]
    %v103 = vld [vmem:[%s1 + $0x60] sm:$0xff]
    %v104 = vld [vmem:[%s1 + $0x68] sm:$0xff]
    %v105 = vld [vmem:[%s1 + $0x70] sm:$0xff]
    %v106 = vld [vmem:[%s1 + $0x78] sm:$0xff]
    %v107 = vld [vmem:[%s1 + $0x80] sm:$0xff]
    %v108 = vld [vmem:[%s1 + $0x88] sm:$0xff]
    %v109 = vld [vmem:[%s1 + $0x90] sm:$0xff]
    %v110 = vld [vmem:[%s1 + $0x98] sm:$0xff]
    %v111 = vld [vmem:[%s1 + $0xa0] sm:$0xff]
    %v112 = vld [vmem:[%s1 + $0xa8] sm:$0xff]
    %v113 = vld [vmem:[%s1 + $0xb0] sm:$0xff]
    %v114 = vld [vmem:[%s1 + $0xb8] sm:$0xff]
    %v115 = vld [vmem:[%s1 + $0xc0] sm:$0xff]
    %v116 = vld [vmem:[%s1 + $0xc8] sm:$0xff]
    %v117 = vld [vmem:[%s1 + $0xd0] sm:$0xff]
    %v118 = vld [vmem:[%s1 + $0xd8] sm:$0xff]
    %v119 = vld [vmem:[%s1 + $0xe0] sm:$0xff]
    %v120 = vld [vmem:[%s1 + $0xe8] sm:$0xff]
    %v121 = vld [vmem:[%s1 + $0xf0] sm:$0xff]
    %v122 = vld [vmem:[%s1 + $0xf8] sm:$0xff]
    %v123 = vld [vmem:[%s1 + $0x100] sm:$0xff]
    %v124 = vld [vmem:[%s1 + $0x108] sm:$0xff]
    %v125 = vld [vmem:[%s1 + $0x110] sm:$0xff]
    %v126 = vld [vmem:[%s1 + $0x118] sm:$0xff]
    %v127 = vld [vmem:[%s1 + $0x120] sm:$0xff]
    %v128 = vld [vmem:[%s1 + $0x128] sm:$0xff]
    %v129 = vld [vmem:[%s1 + $0x130] sm:$0xff]
    %v130 = vld [vmem:[%s1 + $0x138] sm:$0xff]
    %v131 = vld [vmem:[%s1 + $0x140] sm:$0xff]
    %v132 = vld [vmem:[%s1 + $0x148] sm:$0xff]
    %v133 = vld [vmem:[%s1 + $0x150] sm:$0xff]
    %v134 = vld [vmem:[%s1 + $0x158] sm:$0xff]
    %v135 = vld [vmem:[%s1 + $0x160] sm:$0xff]
    %v136 = vld [vmem:[%s1 + $0x168] sm:$0xff]
    %v137 = vld [vmem:[%s1 + $0x170] sm:$0xff]
    %v138 = vld [vmem:[%s1 + $0x178] sm:$0xff]
    %v139 = vld [vmem:[%s1 + $0x180] sm:$0xff]
    %v140 = vld [vmem:[%s1 + $0x188] sm:$0xff]
    %v141 = vld [vmem:[%s1 + $0x190] sm:$0xff]
    %v142 = vld [vmem:[%s1 + $0x198] sm:$0xff]
    %v143 = vld [vmem:[%s1 + $0x1a0] sm:$0xff]
    %v144 = vld [vmem:[%s1 + $0x1a8] sm:$0xff]
    %v145 = vld [vmem:[%s1 + $0x1b0] sm:$0xff]
    %v146 = vld [vmem:[%s1 + $0x1b8] sm:$0xff]
    %v147 = vld [vmem:[%s1 + $0x1c0] sm:$0xff]
    %v148 = vld [vmem:[%s1 + $0x1c8] sm:$0xff]
    %v149 = vld [vmem:[%s1 + $0x1d0] sm:$0xff]
    %v150 = vld [vmem:[%s1 + $0x1d8] sm:$0xff]
    %v151 = vld [vmem:[%s1 + $0x1e0] sm:$0xff]
    %v152 = vld [vmem:[%s1 + $0x1e8] sm:$0xff]
    %v153 = vld [vmem:[%s1 + $0x1f0] sm:$0xff]
    %v154 = vld [vmem:[%s1 + $0x1f8] sm:$0xff]
    %155 = vxpose.xlu0.b32.start [1/16] %v27, 128
    %156 = vxpose.xlu0.b32.cont [2/16] %v28, 128
    %157 = vxpose.xlu0.b32.cont [3/16] %v29, 128
    %158 = vxpose.xlu0.b32.cont [4/16] %v30, 128
    %159 = vxpose.xlu0.b32.cont [5/16] %v31, 128
    %160 = vxpose.xlu0.b32.cont [6/16] %v32, 128
    %161 = vxpose.xlu0.b32.cont [7/16] %v33, 128
    %162 = vxpose.xlu0.b32.cont [8/16] %v34, 128
    %163 = vxpose.xlu0.b32.cont [9/16] %v35, 128
    %164 = vxpose.xlu0.b32.cont [10/16] %v36, 128
    %165 = vxpose.xlu0.b32.cont [11/16] %v37, 128
    %166 = vxpose.xlu0.b32.cont [12/16] %v38, 128
    %167 = vxpose.xlu0.b32.cont [13/16] %v39, 128
    %168 = vxpose.xlu0.b32.cont [14/16] %v40, 128
    %169 = vxpose.xlu0.b32.cont [15/16] %v41, 128
    %170 = vxpose.xlu0.b32.end [16/16] %v42, 128
    %v171 = vpop.trf.xlu0
    %v172 = vpop.trf.xlu0
    %v173 = vpop.trf.xlu0
    %v174 = vpop.trf.xlu0
    %v175 = vpop.trf.xlu0
    %v176 = vpop.trf.xlu0
    %v177 = vpop.trf.xlu0
    %v178 = vpop.trf.xlu0
    %v179 = vpop.trf.xlu0
    %v180 = vpop.trf.xlu0
    %v181 = vpop.trf.xlu0
    %v182 = vpop.trf.xlu0
    %v183 = vpop.trf.xlu0
    %v184 = vpop.trf.xlu0
    %v185 = vpop.trf.xlu0
    %v186 = vpop.trf.xlu0
    %187 = vxpose.xlu0.b32.start [1/16] %v43, 128
    %188 = vxpose.xlu0.b32.cont [2/16] %v44, 128
    %189 = vxpose.xlu0.b32.cont [3/16] %v45, 128
    %190 = vxpose.xlu0.b32.cont [4/16] %v46, 128
    %191 = vxpose.xlu0.b32.cont [5/16] %v47, 128
    %192 = vxpose.xlu0.b32.cont [6/16] %v48, 128
    %193 = vxpose.xlu0.b32.cont [7/16] %v49, 128
    %194 = vxpose.xlu0.b32.cont [8/16] %v50, 128
    %195 = vxpose.xlu0.b32.cont [9/16] %v51, 128
    %196 = vxpose.xlu0.b32.cont [10/16] %v52, 128
    %197 = vxpose.xlu0.b32.cont [11/16] %v53, 128
    %198 = vxpose.xlu0.b32.cont [12/16] %v54, 128
    %199 = vxpose.xlu0.b32.cont [13/16] %v55, 128
    %200 = vxpose.xlu0.b32.cont [14/16] %v56, 128
    %201 = vxpose.xlu0.b32.cont [15/16] %v57, 128
    %202 = vxpose.xlu0.b32.end [16/16] %v58, 128
    %v203 = vpop.trf.xlu0
    %v204 = vpop.trf.xlu0
    %v205 = vpop.trf.xlu0
    %v206 = vpop.trf.xlu0
    %v207 = vpop.trf.xlu0
    %v208 = vpop.trf.xlu0
    %v209 = vpop.trf.xlu0
    %v210 = vpop.trf.xlu0
    %v211 = vpop.trf.xlu0
    %v212 = vpop.trf.xlu0
    %v213 = vpop.trf.xlu0
    %v214 = vpop.trf.xlu0
    %v215 = vpop.trf.xlu0
    %v216 = vpop.trf.xlu0
    %v217 = vpop.trf.xlu0
    %v218 = vpop.trf.xlu0
    %219 = vxpose.xlu0.b32.start [1/16] %v59, 128
    %220 = vxpose.xlu0.b32.cont [2/16] %v60, 128
    %221 = vxpose.xlu0.b32.cont [3/16] %v61, 128
    %222 = vxpose.xlu0.b32.cont [4/16] %v62, 128
    %223 = vxpose.xlu0.b32.cont [5/16] %v63, 128
    %224 = vxpose.xlu0.b32.cont [6/16] %v64, 128
    %225 = vxpose.xlu0.b32.cont [7/16] %v65, 128
    %226 = vxpose.xlu0.b32.cont [8/16] %v66, 128
    %227 = vxpose.xlu0.b32.cont [9/16] %v67, 128
    %228 = vxpose.xlu0.b32.cont [10/16] %v68, 128
    %229 = vxpose.xlu0.b32.cont [11/16] %v69, 128
    %230 = vxpose.xlu0.b32.cont [12/16] %v70, 128
    %231 = vxpose.xlu0.b32.cont [13/16] %v71, 128
    %232 = vxpose.xlu0.b32.cont [14/16] %v72, 128
    %233 = vxpose.xlu0.b32.cont [15/16] %v73, 128
    %234 = vxpose.xlu0.b32.end [16/16] %v74, 128
    %v235 = vpop.trf.xlu0
    %v236 = vpop.trf.xlu0
    %v237 = vpop.trf.xlu0
    %v238 = vpop.trf.xlu0
    %v239 = vpop.trf.xlu0
    %v240 = vpop.trf.xlu0
    %v241 = vpop.trf.xlu0
    %v242 = vpop.trf.xlu0
    %v243 = vpop.trf.xlu0
    %v244 = vpop.trf.xlu0
    %v245 = vpop.trf.xlu0
    %v246 = vpop.trf.xlu0
    %v247 = vpop.trf.xlu0
    %v248 = vpop.trf.xlu0
    %v249 = vpop.trf.xlu0
    %v250 = vpop.trf.xlu0
    %251 = vxpose.xlu0.b32.start [1/16] %v75, 128
    %252 = vxpose.xlu0.b32.cont [2/16] %v76, 128
    %253 = vxpose.xlu0.b32.cont [3/16] %v77, 128
    %254 = vxpose.xlu0.b32.cont [4/16] %v78, 128
    %255 = vxpose.xlu0.b32.cont [5/16] %v79, 128
    %256 = vxpose.xlu0.b32.cont [6/16] %v80, 128
    %257 = vxpose.xlu0.b32.cont [7/16] %v81, 128
    %258 = vxpose.xlu0.b32.cont [8/16] %v82, 128
    %259 = vxpose.xlu0.b32.cont [9/16] %v83, 128
    %260 = vxpose.xlu0.b32.cont [10/16] %v84, 128
    %261 = vxpose.xlu0.b32.cont [11/16] %v85, 128
    %262 = vxpose.xlu0.b32.cont [12/16] %v86, 128
    %263 = vxpose.xlu0.b32.cont [13/16] %v87, 128
    %264 = vxpose.xlu0.b32.cont [14/16] %v88, 128
    %265 = vxpose.xlu0.b32.cont [15/16] %v89, 128
    %266 = vxpose.xlu0.b32.end [16/16] %v90, 128
    %v267 = vpop.trf.xlu0
    %v268 = vpop.trf.xlu0
    %v269 = vpop.trf.xlu0
    %v270 = vpop.trf.xlu0
    %v271 = vpop.trf.xlu0
    %v272 = vpop.trf.xlu0
    %v273 = vpop.trf.xlu0
    %v274 = vpop.trf.xlu0
    %v275 = vpop.trf.xlu0
    %v276 = vpop.trf.xlu0
    %v277 = vpop.trf.xlu0
    %v278 = vpop.trf.xlu0
    %v279 = vpop.trf.xlu0
    %v280 = vpop.trf.xlu0
    %v281 = vpop.trf.xlu0
    %v282 = vpop.trf.xlu0
    %283 = vxpose.xlu0.b32.start [1/16] %v91, 128
    %284 = vxpose.xlu0.b32.cont [2/16] %v92, 128
    %285 = vxpose.xlu0.b32.cont [3/16] %v93, 128
    %286 = vxpose.xlu0.b32.cont [4/16] %v94, 128
    %287 = vxpose.xlu0.b32.cont [5/16] %v95, 128
    %288 = vxpose.xlu0.b32.cont [6/16] %v96, 128
    %289 = vxpose.xlu0.b32.cont [7/16] %v97, 128
    %290 = vxpose.xlu0.b32.cont [8/16] %v98, 128
    %291 = vxpose.xlu0.b32.cont [9/16] %v99, 128
    %292 = vxpose.xlu0.b32.cont [10/16] %v100, 128
    %293 = vxpose.xlu0.b32.cont [11/16] %v101, 128
    %294 = vxpose.xlu0.b32.cont [12/16] %v102, 128
    %295 = vxpose.xlu0.b32.cont [13/16] %v103, 128
    %296 = vxpose.xlu0.b32.cont [14/16] %v104, 128
    %297 = vxpose.xlu0.b32.cont [15/16] %v105, 128
    %298 = vxpose.xlu0.b32.end [16/16] %v106, 128
    %v299 = vpop.trf.xlu0
    %v300 = vpop.trf.xlu0
    %v301 = vpop.trf.xlu0
    %v302 = vpop.trf.xlu0
    %v303 = vpop.trf.xlu0
    %v304 = vpop.trf.xlu0
    %v305 = vpop.trf.xlu0
    %v306 = vpop.trf.xlu0
    %v307 = vpop.trf.xlu0
    %v308 = vpop.trf.xlu0
    %v309 = vpop.trf.xlu0
    %v310 = vpop.trf.xlu0
    %v311 = vpop.trf.xlu0
    %v312 = vpop.trf.xlu0
    %v313 = vpop.trf.xlu0
    %v314 = vpop.trf.xlu0
    %315 = vxpose.xlu0.b32.start [1/16] %v107, 128
    %316 = vxpose.xlu0.b32.cont [2/16] %v108, 128
    %317 = vxpose.xlu0.b32.cont [3/16] %v109, 128
    %318 = vxpose.xlu0.b32.cont [4/16] %v110, 128
    %319 = vxpose.xlu0.b32.cont [5/16] %v111, 128
    %320 = vxpose.xlu0.b32.cont [6/16] %v112, 128
    %321 = vxpose.xlu0.b32.cont [7/16] %v113, 128
    %322 = vxpose.xlu0.b32.cont [8/16] %v114, 128
    %323 = vxpose.xlu0.b32.cont [9/16] %v115, 128
    %324 = vxpose.xlu0.b32.cont [10/16] %v116, 128
    %325 = vxpose.xlu0.b32.cont [11/16] %v117, 128
    %326 = vxpose.xlu0.b32.cont [12/16] %v118, 128
    %327 = vxpose.xlu0.b32.cont [13/16] %v119, 128
    %328 = vxpose.xlu0.b32.cont [14/16] %v120, 128
    %329 = vxpose.xlu0.b32.cont [15/16] %v121, 128
    %330 = vxpose.xlu0.b32.end [16/16] %v122, 128
    %v331 = vpop.trf.xlu0
    %v332 = vpop.trf.xlu0
    %v333 = vpop.trf.xlu0
    %v334 = vpop.trf.xlu0
    %v335 = vpop.trf.xlu0
    %v336 = vpop.trf.xlu0
    %v337 = vpop.trf.xlu0
    %v338 = vpop.trf.xlu0
    %v339 = vpop.trf.xlu0
    %v340 = vpop.trf.xlu0
    %v341 = vpop.trf.xlu0
    %v342 = vpop.trf.xlu0
    %v343 = vpop.trf.xlu0
    %v344 = vpop.trf.xlu0
    %v345 = vpop.trf.xlu0
    %v346 = vpop.trf.xlu0
    %347 = vxpose.xlu0.b32.start [1/16] %v123, 128
    %348 = vxpose.xlu0.b32.cont [2/16] %v124, 128
    %349 = vxpose.xlu0.b32.cont [3/16] %v125, 128
    %350 = vxpose.xlu0.b32.cont [4/16] %v126, 128
    %351 = vxpose.xlu0.b32.cont [5/16] %v127, 128
    %352 = vxpose.xlu0.b32.cont [6/16] %v128, 128
    %353 = vxpose.xlu0.b32.cont [7/16] %v129, 128
    %354 = vxpose.xlu0.b32.cont [8/16] %v130, 128
    %355 = vxpose.xlu0.b32.cont [9/16] %v131, 128
    %356 = vxpose.xlu0.b32.cont [10/16] %v132, 128
    %357 = vxpose.xlu0.b32.cont [11/16] %v133, 128
    %358 = vxpose.xlu0.b32.cont [12/16] %v134, 128
    %359 = vxpose.xlu0.b32.cont [13/16] %v135, 128
    %360 = vxpose.xlu0.b32.cont [14/16] %v136, 128
    %361 = vxpose.xlu0.b32.cont [15/16] %v137, 128
    %362 = vxpose.xlu0.b32.end [16/16] %v138, 128
    %v363 = vpop.trf.xlu0
    %v364 = vpop.trf.xlu0
    %v365 = vpop.trf.xlu0
    %v366 = vpop.trf.xlu0
    %v367 = vpop.trf.xlu0
    %v368 = vpop.trf.xlu0
    %v369 = vpop.trf.xlu0
    %v370 = vpop.trf.xlu0
    %v371 = vpop.trf.xlu0
    %v372 = vpop.trf.xlu0
    %v373 = vpop.trf.xlu0
    %v374 = vpop.trf.xlu0
    %v375 = vpop.trf.xlu0
    %v376 = vpop.trf.xlu0
    %v377 = vpop.trf.xlu0
    %v378 = vpop.trf.xlu0
    %379 = vxpose.xlu0.b32.start [1/16] %v139, 128
    %380 = vxpose.xlu0.b32.cont [2/16] %v140, 128
    %381 = vxpose.xlu0.b32.cont [3/16] %v141, 128
    %382 = vxpose.xlu0.b32.cont [4/16] %v142, 128
    %383 = vxpose.xlu0.b32.cont [5/16] %v143, 128
    %384 = vxpose.xlu0.b32.cont [6/16] %v144, 128
    %385 = vxpose.xlu0.b32.cont [7/16] %v145, 128
    %386 = vxpose.xlu0.b32.cont [8/16] %v146, 128
    %387 = vxpose.xlu0.b32.cont [9/16] %v147, 128
    %388 = vxpose.xlu0.b32.cont [10/16] %v148, 128
    %389 = vxpose.xlu0.b32.cont [11/16] %v149, 128
    %390 = vxpose.xlu0.b32.cont [12/16] %v150, 128
    %391 = vxpose.xlu0.b32.cont [13/16] %v151, 128
    %392 = vxpose.xlu0.b32.cont [14/16] %v152, 128
    %393 = vxpose.xlu0.b32.cont [15/16] %v153, 128
    %394 = vxpose.xlu0.b32.end [16/16] %v154, 128
    %v395 = vpop.trf.xlu0
    %v396 = vpop.trf.xlu0
    %v397 = vpop.trf.xlu0
    %v398 = vpop.trf.xlu0
    %v399 = vpop.trf.xlu0
    %v400 = vpop.trf.xlu0
    %v401 = vpop.trf.xlu0
    %v402 = vpop.trf.xlu0
    %v403 = vpop.trf.xlu0
    %v404 = vpop.trf.xlu0
    %v405 = vpop.trf.xlu0
    %v406 = vpop.trf.xlu0
    %v407 = vpop.trf.xlu0
    %v408 = vpop.trf.xlu0
    %v409 = vpop.trf.xlu0
    %v410 = vpop.trf.xlu0
    %v411 = vsub.f32 %v299, %v171
    %v412 = vsub.f32 %v331, %v203
    %v413 = vsub.f32 %v363, %v235
    %v414 = vsub.f32 %v395, %v267
    %v415 = vsub.f32 %v300, %v172
    %v416 = vsub.f32 %v332, %v204
    %v417 = vsub.f32 %v364, %v236
    %v418 = vsub.f32 %v396, %v268
    %v419 = vsub.f32 %v301, %v173
    %v420 = vsub.f32 %v333, %v205
    %v421 = vsub.f32 %v365, %v237
    %v422 = vsub.f32 %v397, %v269
    %v423 = vsub.f32 %v302, %v174
    %v424 = vsub.f32 %v334, %v206
    %v425 = vsub.f32 %v366, %v238
    %v426 = vsub.f32 %v398, %v270
    %v427 = vmul.f32 %v411, %v411
    %v428 = vmul.f32 %v412, %v412
    %v429 = vmul.f32 %v413, %v413
    %v430 = vmul.f32 %v414, %v414
    %v431 = vmul.f32 %v415, %v415
    %v432 = vmul.f32 %v416, %v416
    %v433 = vmul.f32 %v417, %v417
    %v434 = vmul.f32 %v418, %v418
    %v435 = vmul.f32 %v419, %v419
    %v436 = vmul.f32 %v420, %v420
    %v437 = vmul.f32 %v421, %v421
    %v438 = vmul.f32 %v422, %v422
    %v439 = vmul.f32 %v423, %v423
    %v440 = vmul.f32 %v424, %v424
    %v441 = vmul.f32 %v425, %v425
    %v442 = vmul.f32 %v426, %v426
    %v443 = vsel %vm18, 1, 0
    %v444 = vsel %vm19, 1, 0
    %v445 = vsel %vm20, 1, 0
    %v446 = vsel %vm21, 1, 0
    %vm447 = vcmp.eq.s32.totalorder %v443, 1
    %vm448 = vcmp.eq.s32.totalorder %v444, 1
    %vm449 = vcmp.eq.s32.totalorder %v445, 1
    %vm450 = vcmp.eq.s32.totalorder %v446, 1
    %v451 = vsel %vm447, %v427, 0.0
    %v452 = vsel %vm447, %v428, 0.0
    %v453 = vsel %vm447, %v429, 0.0
    %v454 = vsel %vm447, %v430, 0.0
    %v455 = vsel %vm448, %v431, 0.0
    %v456 = vsel %vm448, %v432, 0.0
    %v457 = vsel %vm448, %v433, 0.0
    %v458 = vsel %vm448, %v434, 0.0
    %v459 = vsel %vm449, %v435, 0.0
    %v460 = vsel %vm449, %v436, 0.0
    %v461 = vsel %vm449, %v437, 0.0
    %v462 = vsel %vm449, %v438, 0.0
    %v463 = vsel %vm450, %v439, 0.0
    %v464 = vsel %vm450, %v440, 0.0
    %v465 = vsel %vm450, %v441, 0.0
    %v466 = vsel %vm450, %v442, 0.0
    %v467 = vadd.f32 %v451, %v455
    %v468 = vadd.f32 %v467, %v459
    %vm469 = vcmask 1045504
    %v470 = vsel %vm469, %v463, 0.0
    %v471 = vadd.f32 %v468, %v470
    %v472 = vrot.slane %v471, 4
    %v473 = vadd.f32 %v471, %v472
    %v474 = vrot.slane %v473, 2
    %v475 = vadd.f32 %v473, %v474
    %v476 = vrot.slane %v475, 1
    %v477 = vadd.f32 %v475, %v476
    %v478 = vadd.f32 %v452, %v456
    %v479 = vadd.f32 %v478, %v460
    %v480 = vsel %vm469, %v464, 0.0
    %v481 = vadd.f32 %v479, %v480
    %v482 = vrot.slane %v481, 4
    %v483 = vadd.f32 %v481, %v482
    %v484 = vrot.slane %v483, 2
    %v485 = vadd.f32 %v483, %v484
    %v486 = vrot.slane %v485, 1
    %v487 = vadd.f32 %v485, %v486
    %v488 = vadd.f32 %v453, %v457
    %v489 = vadd.f32 %v488, %v461
    %v490 = vsel %vm469, %v465, 0.0
    %v491 = vadd.f32 %v489, %v490
    %v492 = vrot.slane %v491, 4
    %v493 = vadd.f32 %v491, %v492
    %v494 = vrot.slane %v493, 2
    %v495 = vadd.f32 %v493, %v494
    %v496 = vrot.slane %v495, 1
    %v497 = vadd.f32 %v495, %v496
    %v498 = vadd.f32 %v454, %v458
    %v499 = vadd.f32 %v498, %v462
    %v500 = vsel %vm469, %v466, 0.0
    %v501 = vadd.f32 %v499, %v500
    %v502 = vrot.slane %v501, 4
    %v503 = vadd.f32 %v501, %v502
    %v504 = vrot.slane %v503, 2
    %v505 = vadd.f32 %v503, %v504
    %v506 = vrot.slane %v505, 1
    %v507 = vadd.f32 %v505, %v506
    %v508 = vmul.f32 %v171, 0.5
    %v509 = vmul.f32 %v203, 0.5
    %v510 = vmul.f32 %v235, 0.5
    %v511 = vmul.f32 %v267, 0.5
    %v516 = vrot.slane %v508, 2
    %v517 = vrot.slane %v509, 2
    %v518 = vrot.slane %v510, 2
    %v519 = vrot.slane %v511, 2
    %v524 = vadd.f32 %v171, %v516
    %v525 = vadd.f32 %v203, %v517
    %v526 = vadd.f32 %v235, %v518
    %v527 = vadd.f32 %v267, %v519
    %v528 = vmul.f32 %v299, 0.5
    %v529 = vmul.f32 %v331, 0.5
    %v530 = vmul.f32 %v363, 0.5
    %v531 = vmul.f32 %v395, 0.5
    %v536 = vrot.slane %v528, 2
    %v537 = vrot.slane %v529, 2
    %v538 = vrot.slane %v530, 2
    %v539 = vrot.slane %v531, 2
    %v544 = vadd.f32 %v299, %v536
    %v545 = vadd.f32 %v331, %v537
    %v546 = vadd.f32 %v363, %v538
    %v547 = vadd.f32 %v395, %v539
    %v548 = vmin.f32 %v524, %v544
    %v549 = vmin.f32 %v525, %v545
    %v550 = vmin.f32 %v526, %v546
    %v551 = vmin.f32 %v527, %v547
    %v552 = vsub.f32 %v171, %v516
    %v553 = vsub.f32 %v203, %v517
    %v554 = vsub.f32 %v235, %v518
    %v555 = vsub.f32 %v267, %v519
    %v556 = vsub.f32 %v299, %v536
    %v557 = vsub.f32 %v331, %v537
    %v558 = vsub.f32 %v363, %v538
    %v559 = vsub.f32 %v395, %v539
    %v560 = vmax.f32 %v552, %v556
    %v561 = vmax.f32 %v553, %v557
    %v562 = vmax.f32 %v554, %v558
    %v563 = vmax.f32 %v555, %v559
    %v564 = vsub.f32 %v548, %v560
    %v565 = vsub.f32 %v549, %v561
    %v566 = vsub.f32 %v550, %v562
    %v567 = vsub.f32 %v551, %v563
    %v568 = vmax.f32 %v564, 0.0
    %v569 = vmax.f32 %v565, 0.0
    %v570 = vmax.f32 %v566, 0.0
    %v571 = vmax.f32 %v567, 0.0
    %v576 = vrot.slane %v568, 1
    %v577 = vrot.slane %v569, 1
    %v578 = vrot.slane %v570, 1
    %v579 = vrot.slane %v571, 1
    %v584 = vmul.f32 %v568, %v576
    %v585 = vmul.f32 %v569, %v577
    %v586 = vmul.f32 %v570, %v578
    %v587 = vmul.f32 %v571, %v579
    %v592 = vrot.slane %v171, 1
    %v593 = vrot.slane %v203, 1
    %v594 = vrot.slane %v235, 1
    %v595 = vrot.slane %v267, 1
    %v600 = vmul.f32 %v171, %v592
    %v601 = vmul.f32 %v203, %v593
    %v602 = vmul.f32 %v235, %v594
    %v603 = vmul.f32 %v267, %v595
    %v608 = vrot.slane %v299, 1
    %v609 = vrot.slane %v331, 1
    %v610 = vrot.slane %v363, 1
    %v611 = vrot.slane %v395, 1
    %v616 = vmul.f32 %v299, %v608
    %v617 = vmul.f32 %v331, %v609
    %v618 = vmul.f32 %v363, %v610
    %v619 = vmul.f32 %v395, %v611
    %v620 = vadd.f32 %v600, %v616
    %v621 = vadd.f32 %v601, %v617
    %v622 = vadd.f32 %v602, %v618
    %v623 = vadd.f32 %v603, %v619
    %v628 = vrot.slane %v584, 6
    %v629 = vrot.slane %v585, 6
    %v630 = vrot.slane %v586, 6
    %v631 = vrot.slane %v587, 6
    %v636 = vsub.f32 %v620, %v628
    %v637 = vsub.f32 %v621, %v629
    %v638 = vsub.f32 %v622, %v630
    %v639 = vsub.f32 %v623, %v631
    %v640 = vmax.f32 %v636, 1e-30
    %v641 = vmax.f32 %v637, 1e-30
    %v642 = vmax.f32 %v638, 1e-30
    %v643 = vmax.f32 %v639, 1e-30
    %v648 = vrot.slane %v640, 2
    %v649 = vrot.slane %v641, 2
    %v650 = vrot.slane %v642, 2
    %v651 = vrot.slane %v643, 2
    %v656 = vrcp.pop %v648
    %v657 = vmul.f32 %v648, %v656
    %v658 = vsub.f32 1.0, %v657
    %v659 = vmul.f32 %v656, %v658
    %v660 = vadd.f32 %v656, %v659
    %vm661 = vweird.f32 %v648
    %vm662 = vweird.f32 %v656
    %vm663 = vmor %vm661, %vm662
    %v664 = vsel %vm663, %v656, %v660
    %v665 = vand.u32 2147483647, %v648
    %vm666 = vcmp.eq.f32.partialorder %v665, 8.507059e+37
    %v667 = vand.u32 %v648, 2147483648
    %v668 = vor.u32 1.1754944e-38, %v667
    %v669 = vsel %vm666, %v668, %v664
    %v670 = vmul.f32 %v584, %v669
    %v671 = vrcp.pop %v649
    %v672 = vmul.f32 %v649, %v671
    %v673 = vsub.f32 1.0, %v672
    %v674 = vmul.f32 %v671, %v673
    %v675 = vadd.f32 %v671, %v674
    %vm676 = vweird.f32 %v649
    %vm677 = vweird.f32 %v671
    %vm678 = vmor %vm676, %vm677
    %v679 = vsel %vm678, %v671, %v675
    %v680 = vand.u32 2147483647, %v649
    %vm681 = vcmp.eq.f32.partialorder %v680, 8.507059e+37
    %v682 = vand.u32 %v649, 2147483648
    %v683 = vor.u32 1.1754944e-38, %v682
    %v684 = vsel %vm681, %v683, %v679
    %v685 = vmul.f32 %v585, %v684
    %v686 = vrcp.pop %v650
    %v687 = vmul.f32 %v650, %v686
    %v688 = vsub.f32 1.0, %v687
    %v689 = vmul.f32 %v686, %v688
    %v690 = vadd.f32 %v686, %v689
    %vm691 = vweird.f32 %v650
    %vm692 = vweird.f32 %v686
    %vm693 = vmor %vm691, %vm692
    %v694 = vsel %vm693, %v686, %v690
    %v695 = vand.u32 2147483647, %v650
    %vm696 = vcmp.eq.f32.partialorder %v695, 8.507059e+37
    %v697 = vand.u32 %v650, 2147483648
    %v698 = vor.u32 1.1754944e-38, %v697
    %v699 = vsel %vm696, %v698, %v694
    %v700 = vmul.f32 %v586, %v699
    %v701 = vrcp.pop %v651
    %v702 = vmul.f32 %v651, %v701
    %v703 = vsub.f32 1.0, %v702
    %v704 = vmul.f32 %v701, %v703
    %v705 = vadd.f32 %v701, %v704
    %vm706 = vweird.f32 %v651
    %vm707 = vweird.f32 %v701
    %vm708 = vmor %vm706, %vm707
    %v709 = vsel %vm708, %v701, %v705
    %v710 = vand.u32 2147483647, %v651
    %vm711 = vcmp.eq.f32.partialorder %v710, 8.507059e+37
    %v712 = vand.u32 %v651, 2147483648
    %v713 = vor.u32 1.1754944e-38, %v712
    %v714 = vsel %vm711, %v713, %v709
    %v715 = vmul.f32 %v587, %v714
    %v720 = vrot.slane %v544, 3
    %v721 = vrot.slane %v545, 3
    %v722 = vrot.slane %v546, 3
    %v723 = vrot.slane %v547, 3
    %v728 = vmin.f32 %v524, %v720
    %v729 = vmin.f32 %v525, %v721
    %v730 = vmin.f32 %v526, %v722
    %v731 = vmin.f32 %v527, %v723
    %v736 = vrot.slane %v556, 3
    %v737 = vrot.slane %v557, 3
    %v738 = vrot.slane %v558, 3
    %v739 = vrot.slane %v559, 3
    %v744 = vmax.f32 %v552, %v736
    %v745 = vmax.f32 %v553, %v737
    %v746 = vmax.f32 %v554, %v738
    %v747 = vmax.f32 %v555, %v739
    %v748 = vsub.f32 %v728, %v744
    %v749 = vsub.f32 %v729, %v745
    %v750 = vsub.f32 %v730, %v746
    %v751 = vsub.f32 %v731, %v747
    %v752 = vmul.f32 %v172, 0.5
    %v753 = vmul.f32 %v204, 0.5
    %v754 = vmul.f32 %v236, 0.5
    %v755 = vmul.f32 %v268, 0.5
    %v760 = vrot.slane %v752, 2
    %v761 = vrot.slane %v753, 2
    %v762 = vrot.slane %v754, 2
    %v763 = vrot.slane %v755, 2
    %v768 = vadd.f32 %v171, %v760
    %v769 = vadd.f32 %v203, %v761
    %v770 = vadd.f32 %v235, %v762
    %v771 = vadd.f32 %v267, %v763
    %v772 = vmin.f32 %v768, %v720
    %v773 = vmin.f32 %v769, %v721
    %v774 = vmin.f32 %v770, %v722
    %v775 = vmin.f32 %v771, %v723
    %v776 = vsub.f32 %v171, %v760
    %v777 = vsub.f32 %v203, %v761
    %v778 = vsub.f32 %v235, %v762
    %v779 = vsub.f32 %v267, %v763
    %v780 = vmax.f32 %v776, %v736
    %v781 = vmax.f32 %v777, %v737
    %v782 = vmax.f32 %v778, %v738
    %v783 = vmax.f32 %v779, %v739
    %v784 = vsub.f32 %v772, %v780
    %v785 = vsub.f32 %v773, %v781
    %v786 = vsub.f32 %v774, %v782
    %v787 = vsub.f32 %v775, %v783
    %v788 = vmax.f32 %v748, 0.0
    %v789 = vmax.f32 %v749, 0.0
    %v790 = vmax.f32 %v750, 0.0
    %v791 = vmax.f32 %v751, 0.0
    %v792 = vmax.f32 %v784, 0.0
    %v793 = vmax.f32 %v785, 0.0
    %v794 = vmax.f32 %v786, 0.0
    %v795 = vmax.f32 %v787, 0.0
    %v800 = vrot.slane %v792, 1
    %v801 = vrot.slane %v793, 1
    %v802 = vrot.slane %v794, 1
    %v803 = vrot.slane %v795, 1
    %v808 = vmul.f32 %v788, %v800
    %v809 = vmul.f32 %v789, %v801
    %v810 = vmul.f32 %v790, %v802
    %v811 = vmul.f32 %v791, %v803
    %v816 = vrot.slane %v172, 1
    %v817 = vrot.slane %v204, 1
    %v818 = vrot.slane %v236, 1
    %v819 = vrot.slane %v268, 1
    %v824 = vmul.f32 %v171, %v816
    %v825 = vmul.f32 %v203, %v817
    %v826 = vmul.f32 %v235, %v818
    %v827 = vmul.f32 %v267, %v819
    %v832 = vrot.slane %v616, 3
    %v833 = vrot.slane %v617, 3
    %v834 = vrot.slane %v618, 3
    %v835 = vrot.slane %v619, 3
    %v840 = vadd.f32 %v824, %v832
    %v841 = vadd.f32 %v825, %v833
    %v842 = vadd.f32 %v826, %v834
    %v843 = vadd.f32 %v827, %v835
    %v848 = vrot.slane %v808, 6
    %v849 = vrot.slane %v809, 6
    %v850 = vrot.slane %v810, 6
    %v851 = vrot.slane %v811, 6
    %v856 = vsub.f32 %v840, %v848
    %v857 = vsub.f32 %v841, %v849
    %v858 = vsub.f32 %v842, %v850
    %v859 = vsub.f32 %v843, %v851
    %v860 = vmax.f32 %v856, 1e-30
    %v861 = vmax.f32 %v857, 1e-30
    %v862 = vmax.f32 %v858, 1e-30
    %v863 = vmax.f32 %v859, 1e-30
    %v868 = vrot.slane %v860, 2
    %v869 = vrot.slane %v861, 2
    %v870 = vrot.slane %v862, 2
    %v871 = vrot.slane %v863, 2
    %v876 = vrcp.pop %v868
    %v877 = vmul.f32 %v868, %v876
    %v878 = vsub.f32 1.0, %v877
    %v879 = vmul.f32 %v876, %v878
    %v880 = vadd.f32 %v876, %v879
    %vm881 = vweird.f32 %v868
    %vm882 = vweird.f32 %v876
    %vm883 = vmor %vm881, %vm882
    %v884 = vsel %vm883, %v876, %v880
    %v885 = vand.u32 2147483647, %v868
    %vm886 = vcmp.eq.f32.partialorder %v885, 8.507059e+37
    %v887 = vand.u32 %v868, 2147483648
    %v888 = vor.u32 1.1754944e-38, %v887
    %v889 = vsel %vm886, %v888, %v884
    %v890 = vmul.f32 %v808, %v889
    %v891 = vrcp.pop %v869
    %v892 = vmul.f32 %v869, %v891
    %v893 = vsub.f32 1.0, %v892
    %v894 = vmul.f32 %v891, %v893
    %v895 = vadd.f32 %v891, %v894
    %vm896 = vweird.f32 %v869
    %vm897 = vweird.f32 %v891
    %vm898 = vmor %vm896, %vm897
    %v899 = vsel %vm898, %v891, %v895
    %v900 = vand.u32 2147483647, %v869
    %vm901 = vcmp.eq.f32.partialorder %v900, 8.507059e+37
    %v902 = vand.u32 %v869, 2147483648
    %v903 = vor.u32 1.1754944e-38, %v902
    %v904 = vsel %vm901, %v903, %v899
    %v905 = vmul.f32 %v809, %v904
    %v906 = vrcp.pop %v870
    %v907 = vmul.f32 %v870, %v906
    %v908 = vsub.f32 1.0, %v907
    %v909 = vmul.f32 %v906, %v908
    %v910 = vadd.f32 %v906, %v909
    %vm911 = vweird.f32 %v870
    %vm912 = vweird.f32 %v906
    %vm913 = vmor %vm911, %vm912
    %v914 = vsel %vm913, %v906, %v910
    %v915 = vand.u32 2147483647, %v870
    %vm916 = vcmp.eq.f32.partialorder %v915, 8.507059e+37
    %v917 = vand.u32 %v870, 2147483648
    %v918 = vor.u32 1.1754944e-38, %v917
    %v919 = vsel %vm916, %v918, %v914
    %v920 = vmul.f32 %v810, %v919
    %v921 = vrcp.pop %v871
    %v922 = vmul.f32 %v871, %v921
    %v923 = vsub.f32 1.0, %v922
    %v924 = vmul.f32 %v921, %v923
    %v925 = vadd.f32 %v921, %v924
    %vm926 = vweird.f32 %v871
    %vm927 = vweird.f32 %v921
    %vm928 = vmor %vm926, %vm927
    %v929 = vsel %vm928, %v921, %v925
    %v930 = vand.u32 2147483647, %v871
    %vm931 = vcmp.eq.f32.partialorder %v930, 8.507059e+37
    %v932 = vand.u32 %v871, 2147483648
    %v933 = vor.u32 1.1754944e-38, %v932
    %v934 = vsel %vm931, %v933, %v929
    %v935 = vmul.f32 %v811, %v934
    %v940 = vrot.slane %v890, 5
    %v941 = vrot.slane %v905, 5
    %v942 = vrot.slane %v920, 5
    %v943 = vrot.slane %v935, 5
    %vm948 = vcmp.gt.f32.partialorder %v670, %v940
    %vm949 = vcmp.gt.f32.partialorder %v685, %v941
    %vm950 = vcmp.gt.f32.partialorder %v700, %v942
    %vm951 = vcmp.gt.f32.partialorder %v715, %v943
    %v952 = vmul.f32 %v171, %v171
    %v953 = vmul.f32 %v203, %v203
    %v954 = vmul.f32 %v235, %v235
    %v955 = vmul.f32 %v267, %v267
    %v956 = vmul.f32 %v952, 0.5
    %v957 = vmul.f32 %v953, 0.5
    %v958 = vmul.f32 %v954, 0.5
    %v959 = vmul.f32 %v955, 0.5
    %v960 = vmul.f32 %v172, %v172
    %v961 = vmul.f32 %v204, %v204
    %v962 = vmul.f32 %v236, %v236
    %v963 = vmul.f32 %v268, %v268
    %v964 = vmul.f32 %v960, 0.5
    %v965 = vmul.f32 %v961, 0.5
    %v966 = vmul.f32 %v962, 0.5
    %v967 = vmul.f32 %v963, 0.5
    %v972 = vrot.slane %v427, 1
    %v973 = vrot.slane %v428, 1
    %v974 = vrot.slane %v429, 1
    %v975 = vrot.slane %v430, 1
    %v980 = vadd.f32 %v427, %v972
    %v981 = vadd.f32 %v428, %v973
    %v982 = vadd.f32 %v429, %v974
    %v983 = vadd.f32 %v430, %v975
    %v984 = vmul.f32 %v980, 5.0
    %v985 = vmul.f32 %v981, 5.0
    %v986 = vmul.f32 %v982, 5.0
    %v987 = vmul.f32 %v983, 5.0
    %v988 = vrsqrt.pop %v299
    %v989 = vmul.f32 %v988, %v299
    %v990 = vmul.f32 %v989, %v988
    %v991 = vmul.f32 0.5, %v990
    %v992 = vsub.f32 1.5, %v991
    %v993 = vmul.f32 %v988, %v992
    %v994 = vmul.f32 %v299, %v993
    %vm995 = vcmp.eq.f32.partialorder %v299, inf
    %v996 = vsel %vm995, %v299, %v994
    %vm997 = vcmp.eq.f32.partialorder %v299, 0.0
    %v998 = vand.u32 %v299, 2147483648
    %v999 = vsel %vm997, %v998, %v996
    %v1000 = vrsqrt.pop %v331
    %v1001 = vmul.f32 %v1000, %v331
    %v1002 = vmul.f32 %v1001, %v1000
    %v1003 = vmul.f32 0.5, %v1002
    %v1004 = vsub.f32 1.5, %v1003
    %v1005 = vmul.f32 %v1000, %v1004
    %v1006 = vmul.f32 %v331, %v1005
    %vm1007 = vcmp.eq.f32.partialorder %v331, inf
    %v1008 = vsel %vm1007, %v331, %v1006
    %vm1009 = vcmp.eq.f32.partialorder %v331, 0.0
    %v1010 = vand.u32 %v331, 2147483648
    %v1011 = vsel %vm1009, %v1010, %v1008
    %v1012 = vrsqrt.pop %v363
    %v1013 = vmul.f32 %v1012, %v363
    %v1014 = vmul.f32 %v1013, %v1012
    %v1015 = vmul.f32 0.5, %v1014
    %v1016 = vsub.f32 1.5, %v1015
    %v1017 = vmul.f32 %v1012, %v1016
    %v1018 = vmul.f32 %v363, %v1017
    %vm1019 = vcmp.eq.f32.partialorder %v363, inf
    %v1020 = vsel %vm1019, %v363, %v1018
    %vm1021 = vcmp.eq.f32.partialorder %v363, 0.0
    %v1022 = vand.u32 %v363, 2147483648
    %v1023 = vsel %vm1021, %v1022, %v1020
    %v1024 = vrsqrt.pop %v395
    %v1025 = vmul.f32 %v1024, %v395
    %v1026 = vmul.f32 %v1025, %v1024
    %v1027 = vmul.f32 0.5, %v1026
    %v1028 = vsub.f32 1.5, %v1027
    %v1029 = vmul.f32 %v1024, %v1028
    %v1030 = vmul.f32 %v395, %v1029
    %vm1031 = vcmp.eq.f32.partialorder %v395, inf
    %v1032 = vsel %vm1031, %v395, %v1030
    %vm1033 = vcmp.eq.f32.partialorder %v395, 0.0
    %v1034 = vand.u32 %v395, 2147483648
    %v1035 = vsel %vm1033, %v1034, %v1032
    %v1036 = vrsqrt.pop %v171
    %v1037 = vmul.f32 %v1036, %v171
    %v1038 = vmul.f32 %v1037, %v1036
    %v1039 = vmul.f32 0.5, %v1038
    %v1040 = vsub.f32 1.5, %v1039
    %v1041 = vmul.f32 %v1036, %v1040
    %v1042 = vmul.f32 %v171, %v1041
    %vm1043 = vcmp.eq.f32.partialorder %v171, inf
    %v1044 = vsel %vm1043, %v171, %v1042
    %vm1045 = vcmp.eq.f32.partialorder %v171, 0.0
    %v1046 = vand.u32 %v171, 2147483648
    %v1047 = vsel %vm1045, %v1046, %v1044
    %v1048 = vrsqrt.pop %v203
    %v1049 = vmul.f32 %v1048, %v203
    %v1050 = vmul.f32 %v1049, %v1048
    %v1051 = vmul.f32 0.5, %v1050
    %v1052 = vsub.f32 1.5, %v1051
    %v1053 = vmul.f32 %v1048, %v1052
    %v1054 = vmul.f32 %v203, %v1053
    %vm1055 = vcmp.eq.f32.partialorder %v203, inf
    %v1056 = vsel %vm1055, %v203, %v1054
    %vm1057 = vcmp.eq.f32.partialorder %v203, 0.0
    %v1058 = vand.u32 %v203, 2147483648
    %v1059 = vsel %vm1057, %v1058, %v1056
    %v1060 = vrsqrt.pop %v235
    %v1061 = vmul.f32 %v1060, %v235
    %v1062 = vmul.f32 %v1061, %v1060
    %v1063 = vmul.f32 0.5, %v1062
    %v1064 = vsub.f32 1.5, %v1063
    %v1065 = vmul.f32 %v1060, %v1064
    %v1066 = vmul.f32 %v235, %v1065
    %vm1067 = vcmp.eq.f32.partialorder %v235, inf
    %v1068 = vsel %vm1067, %v235, %v1066
    %vm1069 = vcmp.eq.f32.partialorder %v235, 0.0
    %v1070 = vand.u32 %v235, 2147483648
    %v1071 = vsel %vm1069, %v1070, %v1068
    %v1072 = vrsqrt.pop %v267
    %v1073 = vmul.f32 %v1072, %v267
    %v1074 = vmul.f32 %v1073, %v1072
    %v1075 = vmul.f32 0.5, %v1074
    %v1076 = vsub.f32 1.5, %v1075
    %v1077 = vmul.f32 %v1072, %v1076
    %v1078 = vmul.f32 %v267, %v1077
    %vm1079 = vcmp.eq.f32.partialorder %v267, inf
    %v1080 = vsel %vm1079, %v267, %v1078
    %vm1081 = vcmp.eq.f32.partialorder %v267, 0.0
    %v1082 = vand.u32 %v267, 2147483648
    %v1083 = vsel %vm1081, %v1082, %v1080
    %v1084 = vsub.f32 %v999, %v1047
    %v1085 = vsub.f32 %v1011, %v1059
    %v1086 = vsub.f32 %v1023, %v1071
    %v1087 = vsub.f32 %v1035, %v1083
    %v1088 = vmul.f32 %v1084, %v1084
    %v1089 = vmul.f32 %v1085, %v1085
    %v1090 = vmul.f32 %v1086, %v1086
    %v1091 = vmul.f32 %v1087, %v1087
    %v1096 = vrot.slane %v1088, 1
    %v1097 = vrot.slane %v1089, 1
    %v1098 = vrot.slane %v1090, 1
    %v1099 = vrot.slane %v1091, 1
    %v1104 = vadd.f32 %v1088, %v1096
    %v1105 = vadd.f32 %v1089, %v1097
    %v1106 = vadd.f32 %v1090, %v1098
    %v1107 = vadd.f32 %v1091, %v1099
    %v1108 = vmul.f32 %v1104, 5.0
    %v1109 = vmul.f32 %v1105, 5.0
    %v1110 = vmul.f32 %v1106, 5.0
    %v1111 = vmul.f32 %v1107, 5.0
    %v1116 = vrot.slane %v1108, 2
    %v1117 = vrot.slane %v1109, 2
    %v1118 = vrot.slane %v1110, 2
    %v1119 = vrot.slane %v1111, 2
    %v1124 = vadd.f32 %v984, %v1116
    %v1125 = vadd.f32 %v985, %v1117
    %v1126 = vadd.f32 %v986, %v1118
    %v1127 = vadd.f32 %v987, %v1119
    %v1132 = vrot.slane %v670, 4
    %v1133 = vrot.slane %v685, 4
    %v1134 = vrot.slane %v700, 4
    %v1135 = vrot.slane %v715, 4
    %v1140 = vsub.f32 %v171, %v1132
    %v1141 = vsub.f32 %v203, %v1133
    %v1142 = vsub.f32 %v235, %v1134
    %v1143 = vsub.f32 %v267, %v1135
    %v1144 = vmul.f32 %v1140, %v1140
    %v1145 = vmul.f32 %v1141, %v1141
    %v1146 = vmul.f32 %v1142, %v1142
    %v1147 = vmul.f32 %v1143, %v1143
    %v1152 = vrot.slane %v1144, 4
    %v1153 = vrot.slane %v1145, 4
    %v1154 = vrot.slane %v1146, 4
    %v1155 = vrot.slane %v1147, 4
    %v1160 = vadd.f32 %v1124, %v1152
    %v1161 = vadd.f32 %v1125, %v1153
    %v1162 = vadd.f32 %v1126, %v1154
    %v1163 = vadd.f32 %v1127, %v1155
    %v1168 = vrot.slane %v964, 1
    %v1169 = vrot.slane %v965, 1
    %v1170 = vrot.slane %v966, 1
    %v1171 = vrot.slane %v967, 1
    %v1176 = vadd.f32 %v1160, %v1168
    %v1177 = vadd.f32 %v1161, %v1169
    %v1178 = vadd.f32 %v1162, %v1170
    %v1179 = vadd.f32 %v1163, %v1171
    %v1180 = vrsqrt.pop %v300
    %v1181 = vmul.f32 %v1180, %v300
    %v1182 = vmul.f32 %v1181, %v1180
    %v1183 = vmul.f32 0.5, %v1182
    %v1184 = vsub.f32 1.5, %v1183
    %v1185 = vmul.f32 %v1180, %v1184
    %v1186 = vmul.f32 %v300, %v1185
    %vm1187 = vcmp.eq.f32.partialorder %v300, inf
    %v1188 = vsel %vm1187, %v300, %v1186
    %vm1189 = vcmp.eq.f32.partialorder %v300, 0.0
    %v1190 = vand.u32 %v300, 2147483648
    %v1191 = vsel %vm1189, %v1190, %v1188
    %v1192 = vrsqrt.pop %v332
    %v1193 = vmul.f32 %v1192, %v332
    %v1194 = vmul.f32 %v1193, %v1192
    %v1195 = vmul.f32 0.5, %v1194
    %v1196 = vsub.f32 1.5, %v1195
    %v1197 = vmul.f32 %v1192, %v1196
    %v1198 = vmul.f32 %v332, %v1197
    %vm1199 = vcmp.eq.f32.partialorder %v332, inf
    %v1200 = vsel %vm1199, %v332, %v1198
    %vm1201 = vcmp.eq.f32.partialorder %v332, 0.0
    %v1202 = vand.u32 %v332, 2147483648
    %v1203 = vsel %vm1201, %v1202, %v1200
    %v1204 = vrsqrt.pop %v364
    %v1205 = vmul.f32 %v1204, %v364
    %v1206 = vmul.f32 %v1205, %v1204
    %v1207 = vmul.f32 0.5, %v1206
    %v1208 = vsub.f32 1.5, %v1207
    %v1209 = vmul.f32 %v1204, %v1208
    %v1210 = vmul.f32 %v364, %v1209
    %vm1211 = vcmp.eq.f32.partialorder %v364, inf
    %v1212 = vsel %vm1211, %v364, %v1210
    %vm1213 = vcmp.eq.f32.partialorder %v364, 0.0
    %v1214 = vand.u32 %v364, 2147483648
    %v1215 = vsel %vm1213, %v1214, %v1212
    %v1216 = vrsqrt.pop %v396
    %v1217 = vmul.f32 %v1216, %v396
    %v1218 = vmul.f32 %v1217, %v1216
    %v1219 = vmul.f32 0.5, %v1218
    %v1220 = vsub.f32 1.5, %v1219
    %v1221 = vmul.f32 %v1216, %v1220
    %v1222 = vmul.f32 %v396, %v1221
    %vm1223 = vcmp.eq.f32.partialorder %v396, inf
    %v1224 = vsel %vm1223, %v396, %v1222
    %vm1225 = vcmp.eq.f32.partialorder %v396, 0.0
    %v1226 = vand.u32 %v396, 2147483648
    %v1227 = vsel %vm1225, %v1226, %v1224
    %v1228 = vrsqrt.pop %v172
    %v1229 = vmul.f32 %v1228, %v172
    %v1230 = vmul.f32 %v1229, %v1228
    %v1231 = vmul.f32 0.5, %v1230
    %v1232 = vsub.f32 1.5, %v1231
    %v1233 = vmul.f32 %v1228, %v1232
    %v1234 = vmul.f32 %v172, %v1233
    %vm1235 = vcmp.eq.f32.partialorder %v172, inf
    %v1236 = vsel %vm1235, %v172, %v1234
    %vm1237 = vcmp.eq.f32.partialorder %v172, 0.0
    %v1238 = vand.u32 %v172, 2147483648
    %v1239 = vsel %vm1237, %v1238, %v1236
    %v1240 = vrsqrt.pop %v204
    %v1241 = vmul.f32 %v1240, %v204
    %v1242 = vmul.f32 %v1241, %v1240
    %v1243 = vmul.f32 0.5, %v1242
    %v1244 = vsub.f32 1.5, %v1243
    %v1245 = vmul.f32 %v1240, %v1244
    %v1246 = vmul.f32 %v204, %v1245
    %vm1247 = vcmp.eq.f32.partialorder %v204, inf
    %v1248 = vsel %vm1247, %v204, %v1246
    %vm1249 = vcmp.eq.f32.partialorder %v204, 0.0
    %v1250 = vand.u32 %v204, 2147483648
    %v1251 = vsel %vm1249, %v1250, %v1248
    %v1252 = vrsqrt.pop %v236
    %v1253 = vmul.f32 %v1252, %v236
    %v1254 = vmul.f32 %v1253, %v1252
    %v1255 = vmul.f32 0.5, %v1254
    %v1256 = vsub.f32 1.5, %v1255
    %v1257 = vmul.f32 %v1252, %v1256
    %v1258 = vmul.f32 %v236, %v1257
    %vm1259 = vcmp.eq.f32.partialorder %v236, inf
    %v1260 = vsel %vm1259, %v236, %v1258
    %vm1261 = vcmp.eq.f32.partialorder %v236, 0.0
    %v1262 = vand.u32 %v236, 2147483648
    %v1263 = vsel %vm1261, %v1262, %v1260
    %v1264 = vrsqrt.pop %v268
    %v1265 = vmul.f32 %v1264, %v268
    %v1266 = vmul.f32 %v1265, %v1264
    %v1267 = vmul.f32 0.5, %v1266
    %v1268 = vsub.f32 1.5, %v1267
    %v1269 = vmul.f32 %v1264, %v1268
    %v1270 = vmul.f32 %v268, %v1269
    %vm1271 = vcmp.eq.f32.partialorder %v268, inf
    %v1272 = vsel %vm1271, %v268, %v1270
    %vm1273 = vcmp.eq.f32.partialorder %v268, 0.0
    %v1274 = vand.u32 %v268, 2147483648
    %v1275 = vsel %vm1273, %v1274, %v1272
    %v1276 = vsub.f32 %v1191, %v1239
    %v1277 = vsub.f32 %v1203, %v1251
    %v1278 = vsub.f32 %v1215, %v1263
    %v1279 = vsub.f32 %v1227, %v1275
    %v1280 = vmul.f32 %v1276, %v1276
    %v1281 = vmul.f32 %v1277, %v1277
    %v1282 = vmul.f32 %v1278, %v1278
    %v1283 = vmul.f32 %v1279, %v1279
    %v1288 = vrot.slane %v1280, 1
    %v1289 = vrot.slane %v1281, 1
    %v1290 = vrot.slane %v1282, 1
    %v1291 = vrot.slane %v1283, 1
    %v1296 = vadd.f32 %v1088, %v1288
    %v1297 = vadd.f32 %v1089, %v1289
    %v1298 = vadd.f32 %v1090, %v1290
    %v1299 = vadd.f32 %v1091, %v1291
    %v1300 = vmul.f32 %v1296, 5.0
    %v1301 = vmul.f32 %v1297, 5.0
    %v1302 = vmul.f32 %v1298, 5.0
    %v1303 = vmul.f32 %v1299, 5.0
    %v1308 = vrot.slane %v1300, 2
    %v1309 = vrot.slane %v1301, 2
    %v1310 = vrot.slane %v1302, 2
    %v1311 = vrot.slane %v1303, 2
    %v1316 = vadd.f32 %v984, %v1308
    %v1317 = vadd.f32 %v985, %v1309
    %v1318 = vadd.f32 %v986, %v1310
    %v1319 = vadd.f32 %v987, %v1311
    %v1320 = vrot.slane %v890, 4
    %v1321 = vrot.slane %v905, 4
    %v1322 = vrot.slane %v920, 4
    %v1323 = vrot.slane %v935, 4
    %v1328 = vsub.f32 %v172, %v1320
    %v1329 = vsub.f32 %v204, %v1321
    %v1330 = vsub.f32 %v236, %v1322
    %v1331 = vsub.f32 %v268, %v1323
    %v1332 = vmul.f32 %v1328, %v1328
    %v1333 = vmul.f32 %v1329, %v1329
    %v1334 = vmul.f32 %v1330, %v1330
    %v1335 = vmul.f32 %v1331, %v1331
    %v1340 = vrot.slane %v1332, 4
    %v1341 = vrot.slane %v1333, 4
    %v1342 = vrot.slane %v1334, 4
    %v1343 = vrot.slane %v1335, 4
    %v1348 = vadd.f32 %v1316, %v1340
    %v1349 = vadd.f32 %v1317, %v1341
    %v1350 = vadd.f32 %v1318, %v1342
    %v1351 = vadd.f32 %v1319, %v1343
    %v1356 = vrot.slane %v956, 7
    %v1357 = vrot.slane %v957, 7
    %v1358 = vrot.slane %v958, 7
    %v1359 = vrot.slane %v959, 7
    %v1364 = vadd.f32 %v1348, %v1356
    %v1365 = vadd.f32 %v1349, %v1357
    %v1366 = vadd.f32 %v1350, %v1358
    %v1367 = vadd.f32 %v1351, %v1359
    %vm1368 = vcmp.eq.f32.partialorder %v299, 1.0
    %vm1369 = vcmp.eq.f32.partialorder %v331, 1.0
    %vm1370 = vcmp.eq.f32.partialorder %v363, 1.0
    %vm1371 = vcmp.eq.f32.partialorder %v395, 1.0
    %v1376 = vrot.slane %v1364, 5
    %v1377 = vrot.slane %v1365, 5
    %v1378 = vrot.slane %v1366, 5
    %v1379 = vrot.slane %v1367, 5
    %v1384 = vsel %vm948, %v1176, %v1376
    %v1385 = vsel %vm949, %v1177, %v1377
    %v1386 = vsel %vm950, %v1178, %v1378
    %v1387 = vsel %vm951, %v1179, %v1379
    %v1388 = vadd.f32 %v1384, %v477
    %v1389 = vadd.f32 %v1385, %v487
    %v1390 = vadd.f32 %v1386, %v497
    %v1391 = vadd.f32 %v1387, %v507
    %v1392 = vrot.slane %v964, 5
    %v1393 = vrot.slane %v965, 5
    %v1394 = vrot.slane %v966, 5
    %v1395 = vrot.slane %v967, 5
    %v1400 = vadd.f32 %v956, %v1392
    %v1401 = vadd.f32 %v957, %v1393
    %v1402 = vadd.f32 %v958, %v1394
    %v1403 = vadd.f32 %v959, %v1395
    %v1408 = vrot.slane %v1388, 4
    %v1409 = vrot.slane %v1389, 4
    %v1410 = vrot.slane %v1390, 4
    %v1411 = vrot.slane %v1391, 4
    %v1416 = vsel %vm1368, %v1408, %v1400
    %v1417 = vsel %vm1369, %v1409, %v1401
    %v1418 = vsel %vm1370, %v1410, %v1402
    %v1419 = vsel %vm1371, %v1411, %v1403
    %s1420 = sadd.s32 %s12, 0
    %v1421 = vstv %s1420
    %v1422 = vadd.s32 %v1421, %v23
    %v1423 = vadd.s32 %v1421, %v24
    %v1424 = vadd.s32 %v1421, %v25
    %v1425 = vadd.s32 %v1421, %v26
    %vm1426 = vcmp.lt.s32.totalorder %v1422, 98
    %vm1427 = vcmp.lt.s32.totalorder %v1423, 98
    %vm1428 = vcmp.lt.s32.totalorder %v1424, 98
    %vm1429 = vcmp.lt.s32.totalorder %v1425, 98
    %v1430 = vsel %vm1426, %v1416, 0.0
    %v1431 = vsel %vm1427, %v1417, 0.0
    %v1432 = vsel %vm1428, %v1418, 0.0
    %v1433 = vsel %vm1429, %v1419, 0.0
    %v1434 = vadd.f32 %v1430, 0.0
    %v1435 = vadd.f32 %v1431, 0.0
    %v1436 = vadd.f32 %v1432, 0.0
    %v1437 = vadd.f32 %v1433, 0.0
    %1442 = vst [vmem:[#allocation1] sm:$0xff] %v1434
    %1443 = vst [vmem:[#allocation1 + $0x9] sm:$0xff] %v1435
    %1444 = vst [vmem:[#allocation1 + $0x12] sm:$0xff] %v1436
    %1445 = vst [vmem:[#allocation1 + $0x1b] sm:$0xff] %v1437
    %s1446 = scalar_lea.vmem [#allocation1], 4
    %v1447 = vld [vmem:[%s1446] ss:$9 sm:$0xff]
    %v1449 = vlaneseq
    %vm1450 = vcmp.ge.s32.totalorder %v1449, 0
    %vm1451 = vcmp.lt.s32.totalorder %v1449, 512
    %vm1452 = vmand %vm1450, %vm1451
    %1453 = vst.msk [vmem:[#allocation2] sm:$0xf] %vm1452, %v1447
    // Predicated region
    $region10: #{tpu_custom_call.1} parent=1 // pred_check
      _
    $region11: #{tpu_custom_call.1} parent=1 // pred_check_branch
      %1455 = sbr.rel (0) target = $region13
    $region12: #{tpu_custom_call.1} parent=1 // pred_region
      %1457 = vsyncadd [#allocation3], 0
      %s1459 = sshll.u32 [#allocation2], 4
      %s1460 = int_to_ptr.vmem [resolvable:$true] %s1459
      %s1461 = sshll.u32 %s2, 4
      %s1462 = int_to_ptr.hbm [resolvable:$true] %s1461
      %1464 = dma.vmem_to_hbm [thread:$0]  %s1460, 64, %s1462, [#allocation3]
    $region13: #{tpu_custom_call.1} parent=1 // pred_fallthru
      _
    // Predicated region
    $region14: #{tpu_custom_call.1} parent=1 // pred_check
      _
    $region15: #{tpu_custom_call.1} parent=1 // pred_check_branch
      %1466 = sbr.rel (0) target = $region17
    $region16: #{tpu_custom_call.1} parent=1 // pred_region
      %1468 = dma.done [#allocation3], 64
    $region17: #{tpu_custom_call.1} parent=1 // pred_fallthru
      _
    %1469 = vsyncpa [#allocation3], 1

// kernel: tpu_custom_call.1
$region0: #{tpu_custom_call.1}
  #allocation0 [shape = 'u32[]', space=smem, size = 0x4, offset = 0x4, fixed_abs, tag = 'smem constant byte address 0x4 - core index']
  #allocation1 [shape = 'u32[72,128]{1,0:T(1,128)}', space=vmem, size = 0x9000, scoped, tag = 'internal scratch']
  %s0 = inlined_call_operand.hbm [shape: f32[30,8,128], index: 0, kind: input, shape index: {}]
  %s1 = inlined_call_operand.hbm [shape: f32[30,8,128], index: 1, kind: input, shape index: {}]
  %s2 = inlined_call_operand.hbm [shape: f32[1,8,128], index: 2, kind: output, shape index: {}]
  %s3 = sld [smem:[#allocation0]]
  $region26: #{tpu_custom_call.1} parent=0
    _
  %s5 = ssub.s32 1, %s3
  %s6 = scalar_select 0, %s5, %s3
  $region1: #{tpu_custom_call.1} parent=0
    #allocation2 [shape = 'u8[122880]{0}', space=vmem, size = 0x1e000, scoped, tag = 'input window, operand 0, single buffered']
    #allocation3 [shape = 's32[1]{0}', space=sflag, size = 0x4, scoped, tag = 'scoped memory for tpu_custom_call.1']
    #allocation4 [shape = 's32[1]{0}', space=sflag, size = 0x4, scoped, tag = 'scoped memory for tpu_custom_call.1']
    #allocation5 [shape = 'u8[122880]{0}', space=vmem, size = 0x1e000, scoped, tag = 'input window, operand 1, single buffered']
    #allocation6 [shape = 's32[1]{0}', space=sflag, size = 0x4, scoped, tag = 'scoped memory for tpu_custom_call.1']
    #allocation7 [shape = 'u8[4096]{0}', space=vmem, size = 0x1000, scoped, tag = 'output window, operand 0, single buffered']
    %7 = vsyncpa [#allocation3], 0
    %8 = vsyncpa [#allocation6], 0
    %9 = vsyncpa [#allocation4], 0
    // Predicated region
    $region2: #{tpu_custom_call.1} parent=1 // pred_check
      _
    $region3: #{tpu_custom_call.1} parent=1 // pred_check_branch
      %11 = sbr.rel (0) target = $region5
    $region4: #{tpu_custom_call.1} parent=1 // pred_region
      %13 = vsyncadd [#allocation3], 0
      %s14 = sshll.u32 %s0, 4
      %s15 = int_to_ptr.hbm [resolvable:$true] %s14
      %s16 = sshll.u32 [#allocation2], 4
      %s17 = int_to_ptr.vmem [resolvable:$true] %s16
      %22 = dma.hbm_to_vmem [thread:$0]  %s15, 3840, %s17, [#allocation3], 128, 128, 8
    $region5: #{tpu_custom_call.1} parent=1 // pred_fallthru
      _
    // Predicated region
    $region6: #{tpu_custom_call.1} parent=1 // pred_check
      _
    $region7: #{tpu_custom_call.1} parent=1 // pred_check_branch
      %24 = sbr.rel (0) target = $region9
    $region8: #{tpu_custom_call.1} parent=1 // pred_region
      %26 = vsyncadd [#allocation6], 0
      %s27 = sshll.u32 %s1, 4
      %s28 = int_to_ptr.hbm [resolvable:$true] %s27
      %s29 = sshll.u32 [#allocation5], 4
      %s30 = int_to_ptr.vmem [resolvable:$true] %s29
      %35 = dma.hbm_to_vmem [thread:$0]  %s28, 3840, %s30, [#allocation6], 128, 128, 8
    $region9: #{tpu_custom_call.1} parent=1 // pred_fallthru
      _
    // Predicated region
    $region10: #{tpu_custom_call.1} parent=1 // pred_check
      _
    $region11: #{tpu_custom_call.1} parent=1 // pred_check_branch
      %37 = sbr.rel (0) target = $region13
    $region12: #{tpu_custom_call.1} parent=1 // pred_region
      %39 = dma.done [#allocation3], 3840
    $region13: #{tpu_custom_call.1} parent=1 // pred_fallthru
      _
    // Predicated region
    $region14: #{tpu_custom_call.1} parent=1 // pred_check
      _
    $region15: #{tpu_custom_call.1} parent=1 // pred_check_branch
      %41 = sbr.rel (0) target = $region17
    $region16: #{tpu_custom_call.1} parent=1 // pred_region
      %43 = dma.done [#allocation6], 3840
    $region17: #{tpu_custom_call.1} parent=1 // pred_fallthru
      _
    %s44 = scalar_lea.vmem [#allocation5], 80
    %v45 = vld [vmem:[%s44] sm:$0xff]
    %s46 = scalar_lea.vmem [#allocation2], 80
    %v47 = vld [vmem:[%s46] sm:$0xff]
    %v48 = vsub.f32 %v45, %v47
    %v49 = vmul.f32 %v48, %v48
    %v50 = vadd.f32 %v49, 0.0
    %s51 = scalar_lea.vmem [#allocation5], 88
    %v52 = vld [vmem:[%s51] sm:$0xff]
    %s53 = scalar_lea.vmem [#allocation2], 88
    %v54 = vld [vmem:[%s53] sm:$0xff]
    %v55 = vsub.f32 %v52, %v54
    %v56 = vmul.f32 %v55, %v55
    %v57 = vadd.f32 %v50, %v56
    %s58 = scalar_lea.vmem [#allocation5], 96
    %v59 = vld [vmem:[%s58] sm:$0xff]
    %s60 = scalar_lea.vmem [#allocation2], 96
    %v61 = vld [vmem:[%s60] sm:$0xff]
    %v62 = vsub.f32 %v59, %v61
    %v63 = vmul.f32 %v62, %v62
    %v64 = vadd.f32 %v57, %v63
    %s65 = scalar_lea.vmem [#allocation5], 104
    %v66 = vld [vmem:[%s65] sm:$0xff]
    %s67 = scalar_lea.vmem [#allocation2], 104
    %v68 = vld [vmem:[%s67] sm:$0xff]
    %v69 = vsub.f32 %v66, %v68
    %v70 = vmul.f32 %v69, %v69
    %v71 = vadd.f32 %v64, %v70
    %s72 = scalar_lea.vmem [#allocation5], 112
    %v73 = vld [vmem:[%s72] sm:$0xff]
    %s74 = scalar_lea.vmem [#allocation2], 112
    %v75 = vld [vmem:[%s74] sm:$0xff]
    %v76 = vsub.f32 %v73, %v75
    %v77 = vmul.f32 %v76, %v76
    %v78 = vadd.f32 %v71, %v77
    %s79 = scalar_lea.vmem [#allocation5], 120
    %v80 = vld [vmem:[%s79] sm:$0xff]
    %s81 = scalar_lea.vmem [#allocation2], 120
    %v82 = vld [vmem:[%s81] sm:$0xff]
    %v83 = vsub.f32 %v80, %v82
    %v84 = vmul.f32 %v83, %v83
    %v85 = vadd.f32 %v78, %v84
    %s86 = scalar_lea.vmem [#allocation5], 128
    %v87 = vld [vmem:[%s86] sm:$0xff]
    %s88 = scalar_lea.vmem [#allocation2], 128
    %v89 = vld [vmem:[%s88] sm:$0xff]
    %v90 = vsub.f32 %v87, %v89
    %v91 = vmul.f32 %v90, %v90
    %v92 = vadd.f32 %v85, %v91
    %s93 = scalar_lea.vmem [#allocation5], 136
    %v94 = vld [vmem:[%s93] sm:$0xff]
    %s95 = scalar_lea.vmem [#allocation2], 136
    %v96 = vld [vmem:[%s95] sm:$0xff]
    %v97 = vsub.f32 %v94, %v96
    %v98 = vmul.f32 %v97, %v97
    %v99 = vadd.f32 %v92, %v98
    %s100 = scalar_lea.vmem [#allocation5], 144
    %v101 = vld [vmem:[%s100] sm:$0xff]
    %s102 = scalar_lea.vmem [#allocation2], 144
    %v103 = vld [vmem:[%s102] sm:$0xff]
    %v104 = vsub.f32 %v101, %v103
    %v105 = vmul.f32 %v104, %v104
    %v106 = vadd.f32 %v99, %v105
    %s107 = scalar_lea.vmem [#allocation5], 152
    %v108 = vld [vmem:[%s107] sm:$0xff]
    %s109 = scalar_lea.vmem [#allocation2], 152
    %v110 = vld [vmem:[%s109] sm:$0xff]
    %v111 = vsub.f32 %v108, %v110
    %v112 = vmul.f32 %v111, %v111
    %v113 = vadd.f32 %v106, %v112
    %s114 = scalar_lea.vmem [#allocation5], 160
    %v115 = vld [vmem:[%s114] sm:$0xff]
    %s116 = scalar_lea.vmem [#allocation2], 160
    %v117 = vld [vmem:[%s116] sm:$0xff]
    %v118 = vsub.f32 %v115, %v117
    %v119 = vmul.f32 %v118, %v118
    %v120 = vadd.f32 %v113, %v119
    %s121 = scalar_lea.vmem [#allocation5], 168
    %v122 = vld [vmem:[%s121] sm:$0xff]
    %s123 = scalar_lea.vmem [#allocation2], 168
    %v124 = vld [vmem:[%s123] sm:$0xff]
    %v125 = vsub.f32 %v122, %v124
    %v126 = vmul.f32 %v125, %v125
    %v127 = vadd.f32 %v120, %v126
    %s128 = scalar_lea.vmem [#allocation5], 176
    %v129 = vld [vmem:[%s128] sm:$0xff]
    %s130 = scalar_lea.vmem [#allocation2], 176
    %v131 = vld [vmem:[%s130] sm:$0xff]
    %v132 = vsub.f32 %v129, %v131
    %v133 = vmul.f32 %v132, %v132
    %v134 = vadd.f32 %v127, %v133
    %s135 = scalar_lea.vmem [#allocation5], 184
    %v136 = vld [vmem:[%s135] sm:$0xff]
    %s137 = scalar_lea.vmem [#allocation2], 184
    %v138 = vld [vmem:[%s137] sm:$0xff]
    %v139 = vsub.f32 %v136, %v138
    %v140 = vmul.f32 %v139, %v139
    %v141 = vadd.f32 %v134, %v140
    %s142 = scalar_lea.vmem [#allocation5], 192
    %v143 = vld [vmem:[%s142] sm:$0xff]
    %s144 = scalar_lea.vmem [#allocation2], 192
    %v145 = vld [vmem:[%s144] sm:$0xff]
    %v146 = vsub.f32 %v143, %v145
    %v147 = vmul.f32 %v146, %v146
    %v148 = vadd.f32 %v141, %v147
    %s149 = scalar_lea.vmem [#allocation5], 200
    %v150 = vld [vmem:[%s149] sm:$0xff]
    %s151 = scalar_lea.vmem [#allocation2], 200
    %v152 = vld [vmem:[%s151] sm:$0xff]
    %v153 = vsub.f32 %v150, %v152
    %v154 = vmul.f32 %v153, %v153
    %v155 = vadd.f32 %v148, %v154
    %s156 = scalar_lea.vmem [#allocation5], 208
    %v157 = vld [vmem:[%s156] sm:$0xff]
    %s158 = scalar_lea.vmem [#allocation2], 208
    %v159 = vld [vmem:[%s158] sm:$0xff]
    %v160 = vsub.f32 %v157, %v159
    %v161 = vmul.f32 %v160, %v160
    %v162 = vadd.f32 %v155, %v161
    %s163 = scalar_lea.vmem [#allocation5], 216
    %v164 = vld [vmem:[%s163] sm:$0xff]
    %s165 = scalar_lea.vmem [#allocation2], 216
    %v166 = vld [vmem:[%s165] sm:$0xff]
    %v167 = vsub.f32 %v164, %v166
    %v168 = vmul.f32 %v167, %v167
    %v169 = vadd.f32 %v162, %v168
    %s170 = scalar_lea.vmem [#allocation5], 224
    %v171 = vld [vmem:[%s170] sm:$0xff]
    %s172 = scalar_lea.vmem [#allocation2], 224
    %v173 = vld [vmem:[%s172] sm:$0xff]
    %v174 = vsub.f32 %v171, %v173
    %v175 = vmul.f32 %v174, %v174
    %v176 = vadd.f32 %v169, %v175
    %s177 = scalar_lea.vmem [#allocation5], 232
    %v178 = vld [vmem:[%s177] sm:$0xff]
    %s179 = scalar_lea.vmem [#allocation2], 232
    %v180 = vld [vmem:[%s179] sm:$0xff]
    %v181 = vsub.f32 %v178, %v180
    %v182 = vmul.f32 %v181, %v181
    %v183 = vadd.f32 %v176, %v182
    %v184 = vld [vmem:[#allocation5] sm:$0xff]
    %s185 = scalar_lea.vmem [#allocation5], 8
    %v186 = vld [vmem:[%s185] sm:$0xff]
    %s187 = scalar_lea.vmem [#allocation5], 16
    %v188 = vld [vmem:[%s187] sm:$0xff]
    %s189 = scalar_lea.vmem [#allocation5], 24
    %v190 = vld [vmem:[%s189] sm:$0xff]
    %v191 = vld [vmem:[#allocation2] sm:$0xff]
    %s192 = scalar_lea.vmem [#allocation2], 8
    %v193 = vld [vmem:[%s192] sm:$0xff]
    %s194 = scalar_lea.vmem [#allocation2], 16
    %v195 = vld [vmem:[%s194] sm:$0xff]
    %s196 = scalar_lea.vmem [#allocation2], 24
    %v197 = vld [vmem:[%s196] sm:$0xff]
    %s198 = scalar_lea.vmem [#allocation2], 32
    %v199 = vld [vmem:[%s198] sm:$0xff]
    %s200 = scalar_lea.vmem [#allocation2], 40
    %v201 = vld [vmem:[%s200] sm:$0xff]
    %s202 = scalar_lea.vmem [#allocation2], 48
    %v203 = vld [vmem:[%s202] sm:$0xff]
    %s204 = scalar_lea.vmem [#allocation2], 56
    %v205 = vld [vmem:[%s204] sm:$0xff]
    %s206 = scalar_lea.vmem [#allocation2], 64
    %v207 = vld [vmem:[%s206] sm:$0xff]
    %s208 = scalar_lea.vmem [#allocation2], 72
    %v209 = vld [vmem:[%s208] sm:$0xff]
    %v210 = vmul.f32 %v195, 0.5
    %v211 = vadd.f32 %v191, %v210
    %v212 = vmul.f32 %v188, 0.5
    %v213 = vadd.f32 %v184, %v212
    %v214 = vmin.f32 %v211, %v213
    %v215 = vsub.f32 %v191, %v210
    %v216 = vsub.f32 %v184, %v212
    %v217 = vmax.f32 %v215, %v216
    %v218 = vsub.f32 %v214, %v217
    %v219 = vmul.f32 %v197, 0.5
    %v220 = vadd.f32 %v193, %v219
    %v221 = vmul.f32 %v190, 0.5
    %v222 = vadd.f32 %v186, %v221
    %v223 = vmin.f32 %v220, %v222
    %v224 = vsub.f32 %v193, %v219
    %v225 = vsub.f32 %v186, %v221
    %v226 = vmax.f32 %v224, %v225
    %v227 = vsub.f32 %v223, %v226
    %v228 = vmax.f32 %v218, 0.0
    %v229 = vmax.f32 %v227, 0.0
    %v230 = vmul.f32 %v228, %v229
    %v231 = vmul.f32 %v195, %v197
    %v232 = vmul.f32 %v188, %v190
    %v233 = vadd.f32 %v231, %v232
    %v234 = vsub.f32 %v233, %v230
    %v235 = vmax.f32 %v234, 1e-30
    %v236 = vrcp.pop %v235
    %v237 = vmul.f32 %v235, %v236
    %v238 = vsub.f32 1.0, %v237
    %v239 = vmul.f32 %v236, %v238
    %v240 = vadd.f32 %v236, %v239
    %vm241 = vweird.f32 %v235
    %vm242 = vweird.f32 %v236
    %vm243 = vmor %vm241, %vm242
    %v244 = vsel %vm243, %v236, %v240
    %v245 = vand.u32 2147483647, %v235
    %vm246 = vcmp.eq.f32.partialorder %v245, 8.507059e+37
    %v247 = vand.u32 %v235, 2147483648
    %v248 = vor.u32 1.1754944e-38, %v247
    %v249 = vsel %vm246, %v248, %v244
    %v250 = vmul.f32 %v230, %v249
    %v251 = vmul.f32 %v205, 0.5
    %v252 = vadd.f32 %v201, %v251
    %v253 = vmin.f32 %v252, %v213
    %v254 = vsub.f32 %v201, %v251
    %v255 = vmax.f32 %v254, %v216
    %v256 = vsub.f32 %v253, %v255
    %v257 = vmul.f32 %v207, 0.5
    %v258 = vadd.f32 %v203, %v257
    %v259 = vmin.f32 %v258, %v222
    %v260 = vsub.f32 %v203, %v257
    %v261 = vmax.f32 %v260, %v225
    %v262 = vsub.f32 %v259, %v261
    %v263 = vmax.f32 %v256, 0.0
    %v264 = vmax.f32 %v262, 0.0
    %v265 = vmul.f32 %v263, %v264
    %v266 = vmul.f32 %v205, %v207
    %v267 = vadd.f32 %v266, %v232
    %v268 = vsub.f32 %v267, %v265
    %v269 = vmax.f32 %v268, 1e-30
    %v270 = vrcp.pop %v269
    %v271 = vmul.f32 %v269, %v270
    %v272 = vsub.f32 1.0, %v271
    %v273 = vmul.f32 %v270, %v272
    %v274 = vadd.f32 %v270, %v273
    %vm275 = vweird.f32 %v269
    %vm276 = vweird.f32 %v270
    %vm277 = vmor %vm275, %vm276
    %v278 = vsel %vm277, %v270, %v274
    %v279 = vand.u32 2147483647, %v269
    %vm280 = vcmp.eq.f32.partialorder %v279, 8.507059e+37
    %v281 = vand.u32 %v269, 2147483648
    %v282 = vor.u32 1.1754944e-38, %v281
    %v283 = vsel %vm280, %v282, %v278
    %v284 = vmul.f32 %v265, %v283
    %vm285 = vcmp.gt.f32.partialorder %v250, %v284
    %v286 = vmul.f32 %v199, %v199
    %v287 = vmul.f32 %v286, 0.5
    %v288 = vmul.f32 %v209, %v209
    %v289 = vmul.f32 %v288, 0.5
    %v290 = vsub.f32 %v184, %v191
    %v291 = vmul.f32 %v290, %v290
    %v292 = vsub.f32 %v186, %v193
    %v293 = vmul.f32 %v292, %v292
    %v294 = vadd.f32 %v291, %v293
    %v295 = vmul.f32 %v294, 5.0
    %v296 = vrsqrt.pop %v188
    %v297 = vmul.f32 %v296, %v188
    %v298 = vmul.f32 %v297, %v296
    %v299 = vmul.f32 0.5, %v298
    %v300 = vsub.f32 1.5, %v299
    %v301 = vmul.f32 %v296, %v300
    %v302 = vmul.f32 %v188, %v301
    %vm303 = vcmp.eq.f32.partialorder %v188, inf
    %v304 = vsel %vm303, %v188, %v302
    %vm305 = vcmp.eq.f32.partialorder %v188, 0.0
    %v306 = vand.u32 %v188, 2147483648
    %v307 = vsel %vm305, %v306, %v304
    %v308 = vrsqrt.pop %v195
    %v309 = vmul.f32 %v308, %v195
    %v310 = vmul.f32 %v309, %v308
    %v311 = vmul.f32 0.5, %v310
    %v312 = vsub.f32 1.5, %v311
    %v313 = vmul.f32 %v308, %v312
    %v314 = vmul.f32 %v195, %v313
    %vm315 = vcmp.eq.f32.partialorder %v195, inf
    %v316 = vsel %vm315, %v195, %v314
    %vm317 = vcmp.eq.f32.partialorder %v195, 0.0
    %v318 = vand.u32 %v195, 2147483648
    %v319 = vsel %vm317, %v318, %v316
    %v320 = vsub.f32 %v307, %v319
    %v321 = vmul.f32 %v320, %v320
    %v322 = vrsqrt.pop %v190
    %v323 = vmul.f32 %v322, %v190
    %v324 = vmul.f32 %v323, %v322
    %v325 = vmul.f32 0.5, %v324
    %v326 = vsub.f32 1.5, %v325
    %v327 = vmul.f32 %v322, %v326
    %v328 = vmul.f32 %v190, %v327
    %vm329 = vcmp.eq.f32.partialorder %v190, inf
    %v330 = vsel %vm329, %v190, %v328
    %vm331 = vcmp.eq.f32.partialorder %v190, 0.0
    %v332 = vand.u32 %v190, 2147483648
    %v333 = vsel %vm331, %v332, %v330
    %v334 = vrsqrt.pop %v197
    %v335 = vmul.f32 %v334, %v197
    %v336 = vmul.f32 %v335, %v334
    %v337 = vmul.f32 0.5, %v336
    %v338 = vsub.f32 1.5, %v337
    %v339 = vmul.f32 %v334, %v338
    %v340 = vmul.f32 %v197, %v339
    %vm341 = vcmp.eq.f32.partialorder %v197, inf
    %v342 = vsel %vm341, %v197, %v340
    %vm343 = vcmp.eq.f32.partialorder %v197, 0.0
    %v344 = vand.u32 %v197, 2147483648
    %v345 = vsel %vm343, %v344, %v342
    %v346 = vsub.f32 %v333, %v345
    %v347 = vmul.f32 %v346, %v346
    %v348 = vadd.f32 %v321, %v347
    %v349 = vmul.f32 %v348, 5.0
    %v350 = vadd.f32 %v295, %v349
    %v351 = vsub.f32 %v199, %v250
    %v352 = vmul.f32 %v351, %v351
    %v353 = vadd.f32 %v350, %v352
    %v354 = vadd.f32 %v353, %v289
    %s355 = scalar_lea.vmem [#allocation5], 40
    %v356 = vld [vmem:[%s355] sm:$0xff]
    %v357 = vsub.f32 %v356, %v201
    %v358 = vmul.f32 %v357, %v357
    %s359 = scalar_lea.vmem [#allocation5], 48
    %v360 = vld [vmem:[%s359] sm:$0xff]
    %v361 = vsub.f32 %v360, %v203
    %v362 = vmul.f32 %v361, %v361
    %v363 = vadd.f32 %v358, %v362
    %v364 = vmul.f32 %v363, 5.0
    %s365 = scalar_lea.vmem [#allocation5], 56
    %v366 = vld [vmem:[%s365] sm:$0xff]
    %v367 = vrsqrt.pop %v366
    %v368 = vmul.f32 %v367, %v366
    %v369 = vmul.f32 %v368, %v367
    %v370 = vmul.f32 0.5, %v369
    %v371 = vsub.f32 1.5, %v370
    %v372 = vmul.f32 %v367, %v371
    %v373 = vmul.f32 %v366, %v372
    %vm374 = vcmp.eq.f32.partialorder %v366, inf
    %v375 = vsel %vm374, %v366, %v373
    %vm376 = vcmp.eq.f32.partialorder %v366, 0.0
    %v377 = vand.u32 %v366, 2147483648
    %v378 = vsel %vm376, %v377, %v375
    %v379 = vrsqrt.pop %v205
    %v380 = vmul.f32 %v379, %v205
    %v381 = vmul.f32 %v380, %v379
    %v382 = vmul.f32 0.5, %v381
    %v383 = vsub.f32 1.5, %v382
    %v384 = vmul.f32 %v379, %v383
    %v385 = vmul.f32 %v205, %v384
    %vm386 = vcmp.eq.f32.partialorder %v205, inf
    %v387 = vsel %vm386, %v205, %v385
    %vm388 = vcmp.eq.f32.partialorder %v205, 0.0
    %v389 = vand.u32 %v205, 2147483648
    %v390 = vsel %vm388, %v389, %v387
    %v391 = vsub.f32 %v378, %v390
    %v392 = vmul.f32 %v391, %v391
    %s393 = scalar_lea.vmem [#allocation5], 64
    %v394 = vld [vmem:[%s393] sm:$0xff]
    %v395 = vrsqrt.pop %v394
    %v396 = vmul.f32 %v395, %v394
    %v397 = vmul.f32 %v396, %v395
    %v398 = vmul.f32 0.5, %v397
    %v399 = vsub.f32 1.5, %v398
    %v400 = vmul.f32 %v395, %v399
    %v401 = vmul.f32 %v394, %v400
    %vm402 = vcmp.eq.f32.partialorder %v394, inf
    %v403 = vsel %vm402, %v394, %v401
    %vm404 = vcmp.eq.f32.partialorder %v394, 0.0
    %v405 = vand.u32 %v394, 2147483648
    %v406 = vsel %vm404, %v405, %v403
    %v407 = vrsqrt.pop %v207
    %v408 = vmul.f32 %v407, %v207
    %v409 = vmul.f32 %v408, %v407
    %v410 = vmul.f32 0.5, %v409
    %v411 = vsub.f32 1.5, %v410
    %v412 = vmul.f32 %v407, %v411
    %v413 = vmul.f32 %v207, %v412
    %vm414 = vcmp.eq.f32.partialorder %v207, inf
    %v415 = vsel %vm414, %v207, %v413
    %vm416 = vcmp.eq.f32.partialorder %v207, 0.0
    %v417 = vand.u32 %v207, 2147483648
    %v418 = vsel %vm416, %v417, %v415
    %v419 = vsub.f32 %v406, %v418
    %v420 = vmul.f32 %v419, %v419
    %v421 = vadd.f32 %v392, %v420
    %v422 = vmul.f32 %v421, 5.0
    %v423 = vadd.f32 %v364, %v422
    %v424 = vsub.f32 %v209, %v284
    %v425 = vmul.f32 %v424, %v424
    %v426 = vadd.f32 %v423, %v425
    %v427 = vadd.f32 %v426, %v287
    %s428 = scalar_lea.vmem [#allocation5], 32
    %v429 = vld [vmem:[%s428] sm:$0xff]
    %vm430 = vcmp.eq.f32.partialorder %v429, 1.0
    %v431 = vsel %vm285, %v354, %v427
    %v432 = vadd.f32 %v431, %v183
    %v433 = vadd.f32 %v287, %v289
    %v434 = vsel %vm430, %v432, %v433
    %435 = vst [vmem:[#allocation7] sm:$0xff] %v434
    // Predicated region
    $region18: #{tpu_custom_call.1} parent=1 // pred_check
      _
    $region19: #{tpu_custom_call.1} parent=1 // pred_check_branch
      %437 = sbr.rel (0) target = $region21
    $region20: #{tpu_custom_call.1} parent=1 // pred_region
      %439 = vsyncadd [#allocation4], 0
      %s441 = sshll.u32 [#allocation7], 4
      %s442 = int_to_ptr.vmem [resolvable:$true] %s441
      %s443 = sshll.u32 %s2, 4
      %s444 = int_to_ptr.hbm [resolvable:$true] %s443
      %446 = dma.vmem_to_hbm [thread:$0]  %s442, 128, %s444, [#allocation4]
    $region21: #{tpu_custom_call.1} parent=1 // pred_fallthru
      _
    // Predicated region
    $region22: #{tpu_custom_call.1} parent=1 // pred_check
      _
    $region23: #{tpu_custom_call.1} parent=1 // pred_check_branch
      %448 = sbr.rel (0) target = $region25
    $region24: #{tpu_custom_call.1} parent=1 // pred_region
      %450 = dma.done [#allocation4], 128
    $region25: #{tpu_custom_call.1} parent=1 // pred_fallthru
      _
    %451 = vsyncpa [#allocation3], 1
    %452 = vsyncpa [#allocation6], 1
    %453 = vsyncpa [#allocation4], 1

</llo_original>
